<compile_context>
chip_gen: v7x
topology: tpu7x:2x2x1
jax: 0.10.0
libtpu: 0.0.40
codegen_flags: <defaults>
</compile_context>

<pallas_src>
import jax
import jax.numpy as jnp
from jax import lax
from jax.experimental import pallas as pl
from jax.experimental.pallas import tpu as pltpu


def _rnn_kernel(x_ref,      # (B, T, F) f32
                wih0_ref,   # (F, H)    f32  W_ih0^T
                b0_ref,     # (1, H)    f32  b_ih0 + b_hh0
                whh0_ref,   # (H, H)    f32  W_hh0^T
                wih1_ref,   # (H, H)    f32  W_ih1^T
                whh1_ref,   # (H, H)    f32  W_hh1^T
                b1_ref,     # (1, H)    f32  b_ih1 + b_hh1
                wfc_ref,    # (H, 2)    f32  W_fc^T
                bfc_ref,    # (1, 2)    f32
                out_ref,    # (B, 2)    f32
                xp_ref):    # (T, B, H) f32 VMEM scratch: time-major input projection
    B, T, F = x_ref.shape
    H = whh0_ref.shape[0]

    # ---- hoisted weight / bias loads (resident across the whole recurrence) ----
    whh0 = whh0_ref[...]
    wih1 = wih1_ref[...]
    whh1 = whh1_ref[...]
    b1 = jnp.broadcast_to(b1_ref[...], (B, H))   # hoist the broadcast out of the loop

    # ---- prologue: non-recurrent input projection (off the recurrent critical path) ----
    # One (B*T, F) @ (F, H) matmul, then a static-index scatter into time-major scratch
    # so the recurrence only does cheap leading-axis reads xp_ref[t].
    proj = jnp.dot(x_ref[...].reshape(B * T, F), wih0_ref[...],
                   preferred_element_type=jnp.float32) + b0_ref[...]      # (B*T, H)
    proj = proj.reshape(B, T, H)
    for t in range(T):                      # static indices: plain vst, no dynamic relayout
        xp_ref[t] = proj[:, t, :]

    # ---- recurrence ----
    def step(t, carry):
        h0, h1 = carry                      # (B, H) f32 each
        # r1b depends only on the previous-step h1: issue it first so its MXU latency
        # hides under layer-0's dot + tanh (no lane concat on the serial path anymore).
        r1b = jnp.dot(h1, whh1, preferred_element_type=jnp.float32)
        r0 = jnp.dot(h0, whh0, preferred_element_type=jnp.float32)
        h0_new = jnp.tanh(xp_ref[t] + r0)
        h1_new = jnp.tanh(
            jnp.dot(h0_new, wih1, preferred_element_type=jnp.float32) + r1b + b1)
        return h0_new, h1_new

    h0 = jnp.zeros((B, H), jnp.float32)
    h1 = jnp.zeros((B, H), jnp.float32)
    # Gate full unroll on T *and* the live-state footprint (avoid vreg spills for big B/H).
    state_vregs = pl.cdiv(B, 8) * pl.cdiv(H, 128)        # f32 vregs per (B, H) state tile
    unroll = True if (T <= 32 and state_vregs <= 4) else 8
    h0, h1 = lax.fori_loop(0, T, step, (h0, h1), unroll=unroll)

    # ---- fc head on the last layer-1 hidden state (runs once; tiny (B, 2) store) ----
    out_ref[...] = (
        jnp.dot(h1, wfc_ref[...], preferred_element_type=jnp.float32) + bfc_ref[...]
    ).astype(out_ref.dtype)


def rnn_model_forward(x, params):
    """x: (B, T, F) float32, batch_first.  Returns (B, 2) float32."""
    B, T, F = x.shape
    H = params["w_hh0"].shape[0]

    # One-time weight prep (transposed for right-multiplication; bias pairs pre-summed).
    wih0 = params["w_ih0"].T.astype(jnp.float32)                            # (F, H)
    b0 = (params["b_ih0"] + params["b_hh0"]).reshape(1, H).astype(jnp.float32)
    whh0 = params["w_hh0"].T.astype(jnp.float32)                            # (H, H)
    wih1 = params["w_ih1"].T.astype(jnp.float32)                            # (H, H)
    whh1 = params["w_hh1"].T.astype(jnp.float32)                            # (H, H)
    b1 = (params["b_ih1"] + params["b_hh1"]).reshape(1, H).astype(jnp.float32)
    wfc = params["w_fc"].T.astype(jnp.float32)                              # (H, 2)
    bfc = params["b_fc"].reshape(1, 2).astype(jnp.float32)

    vmem = pltpu.MemorySpace.VMEM
    return pl.pallas_call(
        _rnn_kernel,
        out_shape=jax.ShapeDtypeStruct((B, 2), jnp.float32),
        # No grid: every operand is one full-array VMEM block (single-buffered).
        in_specs=[pl.BlockSpec(memory_space=vmem)] * 9,
        out_specs=pl.BlockSpec(memory_space=vmem),
        scratch_shapes=[pltpu.VMEM((T, B, H), jnp.float32)],
    )(x.astype(jnp.float32), wih0, b0, whh0, wih1, whh1, b1, wfc, bfc)


def init_params(key, input_size, hidden_size):
    """Deterministic init mimicking PyTorch's U(-1/sqrt(H), 1/sqrt(H))."""
    ks = jax.random.split(key, 10)
    s = 1.0 / jnp.sqrt(hidden_size)
    u = lambda k, shape: jax.random.uniform(k, shape, jnp.float32, -s, s)
    return {
        "w_ih0": u(ks[0], (hidden_size, input_size)),
        "w_hh0": u(ks[1], (hidden_size, hidden_size)),
        "b_ih0": u(ks[2], (hidden_size,)),
        "b_hh0": u(ks[3], (hidden_size,)),
        "w_ih1": u(ks[4], (hidden_size, hidden_size)),
        "w_hh1": u(ks[5], (hidden_size, hidden_size)),
        "b_ih1": u(ks[6], (hidden_size,)),
        "b_hh1": u(ks[7], (hidden_size,)),
        "w_fc": u(ks[8], (2, hidden_size)),
        "b_fc": u(ks[9], (2,)),
    }


def rnn_model_reference(x, params):
    """Pure-JAX reference of RNNModel.forward for correctness checking."""
    B, T, F = x.shape
    H = params["w_hh0"].shape[0]
    h0 = jnp.zeros((B, H), jnp.float32)
    h1 = jnp.zeros((B, H), jnp.float32)
    for t in range(T):
        x_t = x[:, t, :]
        h0 = jnp.tanh(x_t @ params["w_ih0"].T + params["b_ih0"]
                      + h0 @ params["w_hh0"].T + params["b_hh0"])
        h1 = jnp.tanh(h0 @ params["w_ih1"].T + params["b_ih1"]
                      + h1 @ params["w_hh1"].T + params["b_hh1"])
    return h1 @ params["w_fc"].T + params["b_fc"]


if __name__ == "__main__":
    # hidden_size = 64 per the PyTorch spec; small B/T/F for the smoke test.
    B, T, F, H = 8, 8, 16, 64

    key = jax.random.PRNGKey(0)
    k_x, k_p = jax.random.split(key)
    x = jax.random.normal(k_x, (B, T, F), jnp.float32)
    params = init_params(k_p, F, H)

    ref = rnn_model_reference(x, params)

    out = jax.block_until_ready(rnn_model_forward(x, params))
    assert out.shape == (B, 2)
    err = float(jnp.max(jnp.abs(out - ref)))
    assert jnp.allclose(out, ref, atol=1e-4, rtol=1e-4), f"max abs err {err}"

    print("KERNEL_OK")
</pallas_src>

<mosaic_0001>
module attributes {stable_mosaic.version = 11 : i64} {
  func.func @_rnn_kernel(%arg0: memref<8x8x16xf32, #tpu.memory_space<vmem>>, %arg1: memref<16x64xf32, #tpu.memory_space<vmem>>, %arg2: memref<1x64xf32, #tpu.memory_space<vmem>>, %arg3: memref<64x64xf32, #tpu.memory_space<vmem>>, %arg4: memref<64x64xf32, #tpu.memory_space<vmem>>, %arg5: memref<64x64xf32, #tpu.memory_space<vmem>>, %arg6: memref<1x64xf32, #tpu.memory_space<vmem>>, %arg7: memref<64x2xf32, #tpu.memory_space<vmem>>, %arg8: memref<1x2xf32, #tpu.memory_space<vmem>>, %arg9: memref<8x2xf32, #tpu.memory_space<vmem>>, %arg10: memref<8x8x64xf32, #tpu.memory_space<vmem>>) attributes {dimension_semantics = [], scalar_prefetch = 0 : i64, scratch_operands = 1 : i64, tpu.core_type = #tpu.core_type<tc>} {
    %c0 = arith.constant 0 : index
    %c0_0 = arith.constant 0 : index
    %0 = vector.load %arg3[%c0, %c0_0] : memref<64x64xf32, #tpu.memory_space<vmem>>, vector<64x64xf32>
    %c0_1 = arith.constant 0 : index
    %c0_2 = arith.constant 0 : index
    %1 = vector.load %arg4[%c0_1, %c0_2] : memref<64x64xf32, #tpu.memory_space<vmem>>, vector<64x64xf32>
    %c0_3 = arith.constant 0 : index
    %c0_4 = arith.constant 0 : index
    %2 = vector.load %arg5[%c0_3, %c0_4] : memref<64x64xf32, #tpu.memory_space<vmem>>, vector<64x64xf32>
    %c0_5 = arith.constant 0 : index
    %c0_6 = arith.constant 0 : index
    %3 = vector.load %arg6[%c0_5, %c0_6] : memref<1x64xf32, #tpu.memory_space<vmem>>, vector<1x64xf32>
    %4 = vector.shape_cast %3 : vector<1x64xf32> to vector<1x64xf32>
    %5 = vector.broadcast %4 : vector<1x64xf32> to vector<8x64xf32>
    %c0_7 = arith.constant 0 : index
    %c0_8 = arith.constant 0 : index
    %c0_9 = arith.constant 0 : index
    %6 = vector.load %arg0[%c0_7, %c0_8, %c0_9] : memref<8x8x16xf32, #tpu.memory_space<vmem>>, vector<8x8x16xf32>
    %7 = vector.shape_cast %6 : vector<8x8x16xf32> to vector<64x16xf32>
    %c0_10 = arith.constant 0 : index
    %c0_11 = arith.constant 0 : index
    %8 = vector.load %arg1[%c0_10, %c0_11] : memref<16x64xf32, #tpu.memory_space<vmem>>, vector<16x64xf32>
    %cst = arith.constant dense<0.000000e+00> : vector<64x64xf32>
    %9 = tpu.matmul %7, %8, %cst {dimension_numbers = #tpu.dot_dimension_numbers<[1], [0], [0], [1], [0, 0, 1, 1], [], []>} : vector<64x16xf32>, vector<16x64xf32>, vector<64x64xf32> -> vector<64x64xf32>
    %c0_12 = arith.constant 0 : index
    %c0_13 = arith.constant 0 : index
    %10 = vector.load %arg2[%c0_12, %c0_13] : memref<1x64xf32, #tpu.memory_space<vmem>>, vector<1x64xf32>
    %11 = vector.broadcast %10 : vector<1x64xf32> to vector<64x64xf32>
    %12 = arith.addf %9, %11 : vector<64x64xf32>
    %13 = vector.shape_cast %12 : vector<64x64xf32> to vector<8x8x64xf32>
    %14 = vector.extract_strided_slice %13 {offsets = [0, 0, 0], sizes = [8, 1, 64], strides = [1, 1, 1]} : vector<8x8x64xf32> to vector<8x1x64xf32>
    %15 = vector.shape_cast %14 : vector<8x1x64xf32> to vector<8x64xf32>
    %c0_14 = arith.constant 0 : index
    %c0_15 = arith.constant 0 : index
    %c0_16 = arith.constant 0 : index
    %16 = vector.load %arg10[%c0_14, %c0_15, %c0_16] : memref<8x8x64xf32, #tpu.memory_space<vmem>>, vector<1x8x64xf32>
    %17 = vector.shape_cast %16 : vector<1x8x64xf32> to vector<8x64xf32>
    %18 = vector.shape_cast %15 : vector<8x64xf32> to vector<1x8x64xf32>
    tpu.vector_store %arg10[%c0_14, %c0_15, %c0_16], %18 {strides = array<i32>} : memref<8x8x64xf32, #tpu.memory_space<vmem>>, vector<1x8x64xf32>,
    %19 = vector.extract_strided_slice %13 {offsets = [0, 1, 0], sizes = [8, 1, 64], strides = [1, 1, 1]} : vector<8x8x64xf32> to vector<8x1x64xf32>
    %20 = vector.shape_cast %19 : vector<8x1x64xf32> to vector<8x64xf32>
    %c1 = arith.constant 1 : index
    %c0_17 = arith.constant 0 : index
    %c0_18 = arith.constant 0 : index
    %21 = vector.load %arg10[%c1, %c0_17, %c0_18] : memref<8x8x64xf32, #tpu.memory_space<vmem>>, vector<1x8x64xf32>
    %22 = vector.shape_cast %21 : vector<1x8x64xf32> to vector<8x64xf32>
    %23 = vector.shape_cast %20 : vector<8x64xf32> to vector<1x8x64xf32>
    tpu.vector_store %arg10[%c1, %c0_17, %c0_18], %23 {strides = array<i32>} : memref<8x8x64xf32, #tpu.memory_space<vmem>>, vector<1x8x64xf32>,
    %24 = vector.extract_strided_slice %13 {offsets = [0, 2, 0], sizes = [8, 1, 64], strides = [1, 1, 1]} : vector<8x8x64xf32> to vector<8x1x64xf32>
    %25 = vector.shape_cast %24 : vector<8x1x64xf32> to vector<8x64xf32>
    %c2 = arith.constant 2 : index
    %c0_19 = arith.constant 0 : index
    %c0_20 = arith.constant 0 : index
    %26 = vector.load %arg10[%c2, %c0_19, %c0_20] : memref<8x8x64xf32, #tpu.memory_space<vmem>>, vector<1x8x64xf32>
    %27 = vector.shape_cast %26 : vector<1x8x64xf32> to vector<8x64xf32>
    %28 = vector.shape_cast %25 : vector<8x64xf32> to vector<1x8x64xf32>
    tpu.vector_store %arg10[%c2, %c0_19, %c0_20], %28 {strides = array<i32>} : memref<8x8x64xf32, #tpu.memory_space<vmem>>, vector<1x8x64xf32>,
    %29 = vector.extract_strided_slice %13 {offsets = [0, 3, 0], sizes = [8, 1, 64], strides = [1, 1, 1]} : vector<8x8x64xf32> to vector<8x1x64xf32>
    %30 = vector.shape_cast %29 : vector<8x1x64xf32> to vector<8x64xf32>
    %c3 = arith.constant 3 : index
    %c0_21 = arith.constant 0 : index
    %c0_22 = arith.constant 0 : index
    %31 = vector.load %arg10[%c3, %c0_21, %c0_22] : memref<8x8x64xf32, #tpu.memory_space<vmem>>, vector<1x8x64xf32>
    %32 = vector.shape_cast %31 : vector<1x8x64xf32> to vector<8x64xf32>
    %33 = vector.shape_cast %30 : vector<8x64xf32> to vector<1x8x64xf32>
    tpu.vector_store %arg10[%c3, %c0_21, %c0_22], %33 {strides = array<i32>} : memref<8x8x64xf32, #tpu.memory_space<vmem>>, vector<1x8x64xf32>,
    %34 = vector.extract_strided_slice %13 {offsets = [0, 4, 0], sizes = [8, 1, 64], strides = [1, 1, 1]} : vector<8x8x64xf32> to vector<8x1x64xf32>
    %35 = vector.shape_cast %34 : vector<8x1x64xf32> to vector<8x64xf32>
    %c4 = arith.constant 4 : index
    %c0_23 = arith.constant 0 : index
    %c0_24 = arith.constant 0 : index
    %36 = vector.load %arg10[%c4, %c0_23, %c0_24] : memref<8x8x64xf32, #tpu.memory_space<vmem>>, vector<1x8x64xf32>
    %37 = vector.shape_cast %36 : vector<1x8x64xf32> to vector<8x64xf32>
    %38 = vector.shape_cast %35 : vector<8x64xf32> to vector<1x8x64xf32>
    tpu.vector_store %arg10[%c4, %c0_23, %c0_24], %38 {strides = array<i32>} : memref<8x8x64xf32, #tpu.memory_space<vmem>>, vector<1x8x64xf32>,
    %39 = vector.extract_strided_slice %13 {offsets = [0, 5, 0], sizes = [8, 1, 64], strides = [1, 1, 1]} : vector<8x8x64xf32> to vector<8x1x64xf32>
    %40 = vector.shape_cast %39 : vector<8x1x64xf32> to vector<8x64xf32>
    %c5 = arith.constant 5 : index
    %c0_25 = arith.constant 0 : index
    %c0_26 = arith.constant 0 : index
    %41 = vector.load %arg10[%c5, %c0_25, %c0_26] : memref<8x8x64xf32, #tpu.memory_space<vmem>>, vector<1x8x64xf32>
    %42 = vector.shape_cast %41 : vector<1x8x64xf32> to vector<8x64xf32>
    %43 = vector.shape_cast %40 : vector<8x64xf32> to vector<1x8x64xf32>
    tpu.vector_store %arg10[%c5, %c0_25, %c0_26], %43 {strides = array<i32>} : memref<8x8x64xf32, #tpu.memory_space<vmem>>, vector<1x8x64xf32>,
    %44 = vector.extract_strided_slice %13 {offsets = [0, 6, 0], sizes = [8, 1, 64], strides = [1, 1, 1]} : vector<8x8x64xf32> to vector<8x1x64xf32>
    %45 = vector.shape_cast %44 : vector<8x1x64xf32> to vector<8x64xf32>
    %c6 = arith.constant 6 : index
    %c0_27 = arith.constant 0 : index
    %c0_28 = arith.constant 0 : index
    %46 = vector.load %arg10[%c6, %c0_27, %c0_28] : memref<8x8x64xf32, #tpu.memory_space<vmem>>, vector<1x8x64xf32>
    %47 = vector.shape_cast %46 : vector<1x8x64xf32> to vector<8x64xf32>
    %48 = vector.shape_cast %45 : vector<8x64xf32> to vector<1x8x64xf32>
    tpu.vector_store %arg10[%c6, %c0_27, %c0_28], %48 {strides = array<i32>} : memref<8x8x64xf32, #tpu.memory_space<vmem>>, vector<1x8x64xf32>,
    %49 = vector.extract_strided_slice %13 {offsets = [0, 7, 0], sizes = [8, 1, 64], strides = [1, 1, 1]} : vector<8x8x64xf32> to vector<8x1x64xf32>
    %50 = vector.shape_cast %49 : vector<8x1x64xf32> to vector<8x64xf32>
    %c7 = arith.constant 7 : index
    %c0_29 = arith.constant 0 : index
    %c0_30 = arith.constant 0 : index
    %51 = vector.load %arg10[%c7, %c0_29, %c0_30] : memref<8x8x64xf32, #tpu.memory_space<vmem>>, vector<1x8x64xf32>
    %52 = vector.shape_cast %51 : vector<1x8x64xf32> to vector<8x64xf32>
    %53 = vector.shape_cast %50 : vector<8x64xf32> to vector<1x8x64xf32>
    tpu.vector_store %arg10[%c7, %c0_29, %c0_30], %53 {strides = array<i32>} : memref<8x8x64xf32, #tpu.memory_space<vmem>>, vector<1x8x64xf32>,
    %cst_31 = arith.constant 0.000000e+00 : f32
    %54 = vector.broadcast %cst_31 : f32 to vector<8x64xf32>
    %cst_32 = arith.constant 0.000000e+00 : f32
    %55 = vector.broadcast %cst_32 : f32 to vector<8x64xf32>
    %c0_i32 = arith.constant 0 : i32
    %cst_33 = arith.constant dense<0.000000e+00> : vector<8x64xf32>
    %56 = tpu.matmul %55, %2, %cst_33 {dimension_numbers = #tpu.dot_dimension_numbers<[1], [0], [0], [1], [0, 0, 1, 1], [], []>} : vector<8x64xf32>, vector<64x64xf32>, vector<8x64xf32> -> vector<8x64xf32>
    %cst_34 = arith.constant dense<0.000000e+00> : vector<8x64xf32>
    %57 = tpu.matmul %54, %0, %cst_34 {dimension_numbers = #tpu.dot_dimension_numbers<[1], [0], [0], [1], [0, 0, 1, 1], [], []>} : vector<8x64xf32>, vector<64x64xf32>, vector<8x64xf32> -> vector<8x64xf32>
    %58 = arith.index_cast %c0_i32 : i32 to index
    %c0_35 = arith.constant 0 : index
    %c0_36 = arith.constant 0 : index
    %59 = vector.load %arg10[%58, %c0_35, %c0_36] : memref<8x8x64xf32, #tpu.memory_space<vmem>>, vector<1x8x64xf32>
    %60 = vector.shape_cast %59 : vector<1x8x64xf32> to vector<8x64xf32>
    %61 = arith.addf %60, %57 : vector<8x64xf32>
    %62 = math.tanh %61 : vector<8x64xf32>
    %cst_37 = arith.constant dense<0.000000e+00> : vector<8x64xf32>
    %63 = tpu.matmul %62, %1, %cst_37 {dimension_numbers = #tpu.dot_dimension_numbers<[1], [0], [0], [1], [0, 0, 1, 1], [], []>} : vector<8x64xf32>, vector<64x64xf32>, vector<8x64xf32> -> vector<8x64xf32>
    %64 = arith.addf %63, %56 : vector<8x64xf32>
    %65 = arith.addf %64, %5 : vector<8x64xf32>
    %66 = math.tanh %65 : vector<8x64xf32>
    %c1_i32 = arith.constant 1 : i32
    %cst_38 = arith.constant dense<0.000000e+00> : vector<8x64xf32>
    %67 = tpu.matmul %66, %2, %cst_38 {dimension_numbers = #tpu.dot_dimension_numbers<[1], [0], [0], [1], [0, 0, 1, 1], [], []>} : vector<8x64xf32>, vector<64x64xf32>, vector<8x64xf32> -> vector<8x64xf32>
    %cst_39 = arith.constant dense<0.000000e+00> : vector<8x64xf32>
    %68 = tpu.matmul %62, %0, %cst_39 {dimension_numbers = #tpu.dot_dimension_numbers<[1], [0], [0], [1], [0, 0, 1, 1], [], []>} : vector<8x64xf32>, vector<64x64xf32>, vector<8x64xf32> -> vector<8x64xf32>
    %69 = arith.index_cast %c1_i32 : i32 to index
    %c0_40 = arith.constant 0 : index
    %c0_41 = arith.constant 0 : index
    %70 = vector.load %arg10[%69, %c0_40, %c0_41] : memref<8x8x64xf32, #tpu.memory_space<vmem>>, vector<1x8x64xf32>
    %71 = vector.shape_cast %70 : vector<1x8x64xf32> to vector<8x64xf32>
    %72 = arith.addf %71, %68 : vector<8x64xf32>
    %73 = math.tanh %72 : vector<8x64xf32>
    %cst_42 = arith.constant dense<0.000000e+00> : vector<8x64xf32>
    %74 = tpu.matmul %73, %1, %cst_42 {dimension_numbers = #tpu.dot_dimension_numbers<[1], [0], [0], [1], [0, 0, 1, 1], [], []>} : vector<8x64xf32>, vector<64x64xf32>, vector<8x64xf32> -> vector<8x64xf32>
    %75 = arith.addf %74, %67 : vector<8x64xf32>
    %76 = arith.addf %75, %5 : vector<8x64xf32>
    %77 = math.tanh %76 : vector<8x64xf32>
    %c2_i32 = arith.constant 2 : i32
    %cst_43 = arith.constant dense<0.000000e+00> : vector<8x64xf32>
    %78 = tpu.matmul %77, %2, %cst_43 {dimension_numbers = #tpu.dot_dimension_numbers<[1], [0], [0], [1], [0, 0, 1, 1], [], []>} : vector<8x64xf32>, vector<64x64xf32>, vector<8x64xf32> -> vector<8x64xf32>
    %cst_44 = arith.constant dense<0.000000e+00> : vector<8x64xf32>
    %79 = tpu.matmul %73, %0, %cst_44 {dimension_numbers = #tpu.dot_dimension_numbers<[1], [0], [0], [1], [0, 0, 1, 1], [], []>} : vector<8x64xf32>, vector<64x64xf32>, vector<8x64xf32> -> vector<8x64xf32>
    %80 = arith.index_cast %c2_i32 : i32 to index
    %c0_45 = arith.constant 0 : index
    %c0_46 = arith.constant 0 : index
    %81 = vector.load %arg10[%80, %c0_45, %c0_46] : memref<8x8x64xf32, #tpu.memory_space<vmem>>, vector<1x8x64xf32>
    %82 = vector.shape_cast %81 : vector<1x8x64xf32> to vector<8x64xf32>
    %83 = arith.addf %82, %79 : vector<8x64xf32>
    %84 = math.tanh %83 : vector<8x64xf32>
    %cst_47 = arith.constant dense<0.000000e+00> : vector<8x64xf32>
    %85 = tpu.matmul %84, %1, %cst_47 {dimension_numbers = #tpu.dot_dimension_numbers<[1], [0], [0], [1], [0, 0, 1, 1], [], []>} : vector<8x64xf32>, vector<64x64xf32>, vector<8x64xf32> -> vector<8x64xf32>
    %86 = arith.addf %85, %78 : vector<8x64xf32>
    %87 = arith.addf %86, %5 : vector<8x64xf32>
    %88 = math.tanh %87 : vector<8x64xf32>
    %c3_i32 = arith.constant 3 : i32
    %cst_48 = arith.constant dense<0.000000e+00> : vector<8x64xf32>
    %89 = tpu.matmul %88, %2, %cst_48 {dimension_numbers = #tpu.dot_dimension_numbers<[1], [0], [0], [1], [0, 0, 1, 1], [], []>} : vector<8x64xf32>, vector<64x64xf32>, vector<8x64xf32> -> vector<8x64xf32>
    %cst_49 = arith.constant dense<0.000000e+00> : vector<8x64xf32>
    %90 = tpu.matmul %84, %0, %cst_49 {dimension_numbers = #tpu.dot_dimension_numbers<[1], [0], [0], [1], [0, 0, 1, 1], [], []>} : vector<8x64xf32>, vector<64x64xf32>, vector<8x64xf32> -> vector<8x64xf32>
    %91 = arith.index_cast %c3_i32 : i32 to index
    %c0_50 = arith.constant 0 : index
    %c0_51 = arith.constant 0 : index
    %92 = vector.load %arg10[%91, %c0_50, %c0_51] : memref<8x8x64xf32, #tpu.memory_space<vmem>>, vector<1x8x64xf32>
    %93 = vector.shape_cast %92 : vector<1x8x64xf32> to vector<8x64xf32>
    %94 = arith.addf %93, %90 : vector<8x64xf32>
    %95 = math.tanh %94 : vector<8x64xf32>
    %cst_52 = arith.constant dense<0.000000e+00> : vector<8x64xf32>
    %96 = tpu.matmul %95, %1, %cst_52 {dimension_numbers = #tpu.dot_dimension_numbers<[1], [0], [0], [1], [0, 0, 1, 1], [], []>} : vector<8x64xf32>, vector<64x64xf32>, vector<8x64xf32> -> vector<8x64xf32>
    %97 = arith.addf %96, %89 : vector<8x64xf32>
    %98 = arith.addf %97, %5 : vector<8x64xf32>
    %99 = math.tanh %98 : vector<8x64xf32>
    %c4_i32 = arith.constant 4 : i32
    %cst_53 = arith.constant dense<0.000000e+00> : vector<8x64xf32>
    %100 = tpu.matmul %99, %2, %cst_53 {dimension_numbers = #tpu.dot_dimension_numbers<[1], [0], [0], [1], [0, 0, 1, 1], [], []>} : vector<8x64xf32>, vector<64x64xf32>, vector<8x64xf32> -> vector<8x64xf32>
    %cst_54 = arith.constant dense<0.000000e+00> : vector<8x64xf32>
    %101 = tpu.matmul %95, %0, %cst_54 {dimension_numbers = #tpu.dot_dimension_numbers<[1], [0], [0], [1], [0, 0, 1, 1], [], []>} : vector<8x64xf32>, vector<64x64xf32>, vector<8x64xf32> -> vector<8x64xf32>
    %102 = arith.index_cast %c4_i32 : i32 to index
    %c0_55 = arith.constant 0 : index
    %c0_56 = arith.constant 0 : index
    %103 = vector.load %arg10[%102, %c0_55, %c0_56] : memref<8x8x64xf32, #tpu.memory_space<vmem>>, vector<1x8x64xf32>
    %104 = vector.shape_cast %103 : vector<1x8x64xf32> to vector<8x64xf32>
    %105 = arith.addf %104, %101 : vector<8x64xf32>
    %106 = math.tanh %105 : vector<8x64xf32>
    %cst_57 = arith.constant dense<0.000000e+00> : vector<8x64xf32>
    %107 = tpu.matmul %106, %1, %cst_57 {dimension_numbers = #tpu.dot_dimension_numbers<[1], [0], [0], [1], [0, 0, 1, 1], [], []>} : vector<8x64xf32>, vector<64x64xf32>, vector<8x64xf32> -> vector<8x64xf32>
    %108 = arith.addf %107, %100 : vector<8x64xf32>
    %109 = arith.addf %108, %5 : vector<8x64xf32>
    %110 = math.tanh %109 : vector<8x64xf32>
    %c5_i32 = arith.constant 5 : i32
    %cst_58 = arith.constant dense<0.000000e+00> : vector<8x64xf32>
    %111 = tpu.matmul %110, %2, %cst_58 {dimension_numbers = #tpu.dot_dimension_numbers<[1], [0], [0], [1], [0, 0, 1, 1], [], []>} : vector<8x64xf32>, vector<64x64xf32>, vector<8x64xf32> -> vector<8x64xf32>
    %cst_59 = arith.constant dense<0.000000e+00> : vector<8x64xf32>
    %112 = tpu.matmul %106, %0, %cst_59 {dimension_numbers = #tpu.dot_dimension_numbers<[1], [0], [0], [1], [0, 0, 1, 1], [], []>} : vector<8x64xf32>, vector<64x64xf32>, vector<8x64xf32> -> vector<8x64xf32>
    %113 = arith.index_cast %c5_i32 : i32 to index
    %c0_60 = arith.constant 0 : index
    %c0_61 = arith.constant 0 : index
    %114 = vector.load %arg10[%113, %c0_60, %c0_61] : memref<8x8x64xf32, #tpu.memory_space<vmem>>, vector<1x8x64xf32>
    %115 = vector.shape_cast %114 : vector<1x8x64xf32> to vector<8x64xf32>
    %116 = arith.addf %115, %112 : vector<8x64xf32>
    %117 = math.tanh %116 : vector<8x64xf32>
    %cst_62 = arith.constant dense<0.000000e+00> : vector<8x64xf32>
    %118 = tpu.matmul %117, %1, %cst_62 {dimension_numbers = #tpu.dot_dimension_numbers<[1], [0], [0], [1], [0, 0, 1, 1], [], []>} : vector<8x64xf32>, vector<64x64xf32>, vector<8x64xf32> -> vector<8x64xf32>
    %119 = arith.addf %118, %111 : vector<8x64xf32>
    %120 = arith.addf %119, %5 : vector<8x64xf32>
    %121 = math.tanh %120 : vector<8x64xf32>
    %c6_i32 = arith.constant 6 : i32
    %cst_63 = arith.constant dense<0.000000e+00> : vector<8x64xf32>
    %122 = tpu.matmul %121, %2, %cst_63 {dimension_numbers = #tpu.dot_dimension_numbers<[1], [0], [0], [1], [0, 0, 1, 1], [], []>} : vector<8x64xf32>, vector<64x64xf32>, vector<8x64xf32> -> vector<8x64xf32>
    %cst_64 = arith.constant dense<0.000000e+00> : vector<8x64xf32>
    %123 = tpu.matmul %117, %0, %cst_64 {dimension_numbers = #tpu.dot_dimension_numbers<[1], [0], [0], [1], [0, 0, 1, 1], [], []>} : vector<8x64xf32>, vector<64x64xf32>, vector<8x64xf32> -> vector<8x64xf32>
    %124 = arith.index_cast %c6_i32 : i32 to index
    %c0_65 = arith.constant 0 : index
    %c0_66 = arith.constant 0 : index
    %125 = vector.load %arg10[%124, %c0_65, %c0_66] : memref<8x8x64xf32, #tpu.memory_space<vmem>>, vector<1x8x64xf32>
    %126 = vector.shape_cast %125 : vector<1x8x64xf32> to vector<8x64xf32>
    %127 = arith.addf %126, %123 : vector<8x64xf32>
    %128 = math.tanh %127 : vector<8x64xf32>
    %cst_67 = arith.constant dense<0.000000e+00> : vector<8x64xf32>
    %129 = tpu.matmul %128, %1, %cst_67 {dimension_numbers = #tpu.dot_dimension_numbers<[1], [0], [0], [1], [0, 0, 1, 1], [], []>} : vector<8x64xf32>, vector<64x64xf32>, vector<8x64xf32> -> vector<8x64xf32>
    %130 = arith.addf %129, %122 : vector<8x64xf32>
    %131 = arith.addf %130, %5 : vector<8x64xf32>
    %132 = math.tanh %131 : vector<8x64xf32>
    %c7_i32 = arith.constant 7 : i32
    %cst_68 = arith.constant dense<0.000000e+00> : vector<8x64xf32>
    %133 = tpu.matmul %132, %2, %cst_68 {dimension_numbers = #tpu.dot_dimension_numbers<[1], [0], [0], [1], [0, 0, 1, 1], [], []>} : vector<8x64xf32>, vector<64x64xf32>, vector<8x64xf32> -> vector<8x64xf32>
    %cst_69 = arith.constant dense<0.000000e+00> : vector<8x64xf32>
    %134 = tpu.matmul %128, %0, %cst_69 {dimension_numbers = #tpu.dot_dimension_numbers<[1], [0], [0], [1], [0, 0, 1, 1], [], []>} : vector<8x64xf32>, vector<64x64xf32>, vector<8x64xf32> -> vector<8x64xf32>
    %135 = arith.index_cast %c7_i32 : i32 to index
    %c0_70 = arith.constant 0 : index
    %c0_71 = arith.constant 0 : index
    %136 = vector.load %arg10[%135, %c0_70, %c0_71] : memref<8x8x64xf32, #tpu.memory_space<vmem>>, vector<1x8x64xf32>
    %137 = vector.shape_cast %136 : vector<1x8x64xf32> to vector<8x64xf32>
    %138 = arith.addf %137, %134 : vector<8x64xf32>
    %139 = math.tanh %138 : vector<8x64xf32>
    %cst_72 = arith.constant dense<0.000000e+00> : vector<8x64xf32>
    %140 = tpu.matmul %139, %1, %cst_72 {dimension_numbers = #tpu.dot_dimension_numbers<[1], [0], [0], [1], [0, 0, 1, 1], [], []>} : vector<8x64xf32>, vector<64x64xf32>, vector<8x64xf32> -> vector<8x64xf32>
    %141 = arith.addf %140, %133 : vector<8x64xf32>
    %142 = arith.addf %141, %5 : vector<8x64xf32>
    %143 = math.tanh %142 : vector<8x64xf32>
    %c8_i32 = arith.constant 8 : i32
    %c0_73 = arith.constant 0 : index
    %c0_74 = arith.constant 0 : index
    %144 = vector.load %arg7[%c0_73, %c0_74] : memref<64x2xf32, #tpu.memory_space<vmem>>, vector<64x2xf32>
    %cst_75 = arith.constant dense<0.000000e+00> : vector<8x2xf32>
    %145 = tpu.matmul %143, %144, %cst_75 {dimension_numbers = #tpu.dot_dimension_numbers<[1], [0], [0], [1], [0, 0, 1, 1], [], []>} : vector<8x64xf32>, vector<64x2xf32>, vector<8x2xf32> -> vector<8x2xf32>
    %c0_76 = arith.constant 0 : index
    %c0_77 = arith.constant 0 : index
    %146 = vector.load %arg8[%c0_76, %c0_77] : memref<1x2xf32, #tpu.memory_space<vmem>>, vector<1x2xf32>
    %147 = vector.broadcast %146 : vector<1x2xf32> to vector<8x2xf32>
    %148 = arith.addf %145, %147 : vector<8x2xf32>
    %c0_78 = arith.constant 0 : index
    %c0_79 = arith.constant 0 : index
    %149 = vector.load %arg9[%c0_78, %c0_79] : memref<8x2xf32, #tpu.memory_space<vmem>>, vector<8x2xf32>
    tpu.vector_store %arg9[%c0_78, %c0_79], %148 {strides = array<i32>} : memref<8x2xf32, #tpu.memory_space<vmem>>, vector<8x2xf32>,
    return
  }
}

</mosaic_0001>

<llo_original>
// kernel: tpu_custom_call.1
$region0: #{tpu_custom_call.1}
  #allocation0 [shape = 'u32[]', space=smem, size = 0x4, offset = 0x4, fixed_abs, tag = 'smem constant byte address 0x4 - core index']
  #allocation1 [shape = 'u32[144,128]{1,0:T(1,128)}', space=vmem, size = 0x12000, scoped, tag = 'internal scratch']
  #allocation2 [shape = 'f32[8,8,64]{2,1,0:T(8,128)}', space=vmem, size = 0x8000, scoped, tag = 'scratch operand']
  %s0 = inlined_call_operand.vmem [shape: f32[8,8,16], index: 0, kind: input, shape index: {}]
  %s1 = inlined_call_operand.hbm [shape: f32[16,64], index: 1, kind: input, shape index: {}]
  %s2 = inlined_call_operand.vmem [shape: f32[1,64], index: 2, kind: input, shape index: {}]
  %s3 = inlined_call_operand.hbm [shape: f32[64,64], index: 3, kind: input, shape index: {}]
  %s4 = inlined_call_operand.hbm [shape: f32[64,64], index: 4, kind: input, shape index: {}]
  %s5 = inlined_call_operand.hbm [shape: f32[64,64], index: 5, kind: input, shape index: {}]
  %s6 = inlined_call_operand.vmem [shape: f32[1,64], index: 6, kind: input, shape index: {}]
  %s7 = inlined_call_operand.vmem [shape: f32[64,2], index: 7, kind: input, shape index: {}]
  %s8 = inlined_call_operand.vmem [shape: f32[1,2], index: 8, kind: input, shape index: {}]
  %s9 = inlined_call_operand.vmem [shape: f32[8,2], index: 9, kind: output, shape index: {}]
  %s10 = sld [smem:[#allocation0]]
  $region62: #{tpu_custom_call.1} parent=0
    _
  %s12 = ssub.s32 1, %s10
  %s13 = scalar_select 0, %s12, %s10
  $region1: #{tpu_custom_call.1} parent=0
    #allocation3 [shape = 'u8[8192]{0}', space=vmem, size = 0x2000, scoped, tag = 'input window, operand 1, single buffered']
    #allocation4 [shape = 's32[1]{0}', space=sflag, size = 0x4, scoped, tag = 'scoped memory for tpu_custom_call.1']
    #allocation5 [shape = 'u8[32768]{0}', space=vmem, size = 0x8000, scoped, tag = 'input window, operand 3, single buffered']
    #allocation6 [shape = 's32[1]{0}', space=sflag, size = 0x4, scoped, tag = 'scoped memory for tpu_custom_call.1']
    #allocation7 [shape = 'u8[32768]{0}', space=vmem, size = 0x8000, scoped, tag = 'input window, operand 4, single buffered']
    #allocation8 [shape = 'u8[32768]{0}', space=vmem, size = 0x8000, scoped, tag = 'input window, operand 5, single buffered']
    #allocation9 [shape = 's32[1]{0}', space=sflag, size = 0x4, scoped, tag = 'scoped memory for tpu_custom_call.1']
    %14 = vsyncpa [#allocation4], 0
    %15 = vsyncpa [#allocation6], 0
    %16 = vsyncpa [#allocation9], 0
    // Predicated region
    $region2: #{tpu_custom_call.1} parent=1 // pred_check
      _
    $region3: #{tpu_custom_call.1} parent=1 // pred_check_branch
      %18 = sbr.rel (0) target = $region5
    $region4: #{tpu_custom_call.1} parent=1 // pred_region
      _
    $region5: #{tpu_custom_call.1} parent=1 // pred_fallthru
      _
    // Predicated region
    $region6: #{tpu_custom_call.1} parent=1 // pred_check
      _
    $region7: #{tpu_custom_call.1} parent=1 // pred_check_branch
      %20 = sbr.rel (0) target = $region9
    $region8: #{tpu_custom_call.1} parent=1 // pred_region
      %s22 = ssub.s32 256, 256
      %23 = vsyncadd [#allocation4], %s22
      %s24 = sshll.u32 [#allocation3], 4
      %s25 = int_to_ptr.vmem [resolvable:$true] %s24
      %30 = dma.hbm_to_vmem [thread:$0]  %s1, 256, %s25, [#allocation4], 128, 128, 8
    $region9: #{tpu_custom_call.1} parent=1 // pred_fallthru
      _
    // Predicated region
    $region10: #{tpu_custom_call.1} parent=1 // pred_check
      _
    $region11: #{tpu_custom_call.1} parent=1 // pred_check_branch
      %32 = sbr.rel (0) target = $region13
    $region12: #{tpu_custom_call.1} parent=1 // pred_region
      _
    $region13: #{tpu_custom_call.1} parent=1 // pred_fallthru
      _
    // Predicated region
    $region14: #{tpu_custom_call.1} parent=1 // pred_check
      _
    $region15: #{tpu_custom_call.1} parent=1 // pred_check_branch
      %34 = sbr.rel (0) target = $region17
    $region16: #{tpu_custom_call.1} parent=1 // pred_region
      %s36 = ssub.s32 1024, 1024
      %37 = vsyncadd [#allocation6], %s36
      %s38 = sshll.u32 [#allocation5], 4
      %s39 = int_to_ptr.vmem [resolvable:$true] %s38
      %44 = dma.hbm_to_vmem [thread:$0]  %s3, 1024, %s39, [#allocation6], 128, 128, 8
    $region17: #{tpu_custom_call.1} parent=1 // pred_fallthru
      _
    // Predicated region
    $region18: #{tpu_custom_call.1} parent=1 // pred_check
      _
    $region19: #{tpu_custom_call.1} parent=1 // pred_check_branch
      %46 = sbr.rel (0) target = $region21
    $region20: #{tpu_custom_call.1} parent=1 // pred_region
      %s48 = ssub.s32 1024, 1024
      %49 = vsyncadd [#allocation6], %s48
      %s50 = sshll.u32 [#allocation7], 4
      %s51 = int_to_ptr.vmem [resolvable:$true] %s50
      %56 = dma.hbm_to_vmem [thread:$0]  %s4, 1024, %s51, [#allocation6], 128, 128, 8
    $region21: #{tpu_custom_call.1} parent=1 // pred_fallthru
      _
    // Predicated region
    $region22: #{tpu_custom_call.1} parent=1 // pred_check
      _
    $region23: #{tpu_custom_call.1} parent=1 // pred_check_branch
      %58 = sbr.rel (0) target = $region25
    $region24: #{tpu_custom_call.1} parent=1 // pred_region
      %s60 = ssub.s32 1024, 1024
      %61 = vsyncadd [#allocation9], %s60
      %s62 = sshll.u32 [#allocation8], 4
      %s63 = int_to_ptr.vmem [resolvable:$true] %s62
      %68 = dma.hbm_to_vmem [thread:$0]  %s5, 1024, %s63, [#allocation9], 128, 128, 8
    $region25: #{tpu_custom_call.1} parent=1 // pred_fallthru
      _
    // Predicated region
    $region26: #{tpu_custom_call.1} parent=1 // pred_check
      _
    $region27: #{tpu_custom_call.1} parent=1 // pred_check_branch
      %70 = sbr.rel (0) target = $region29
    $region28: #{tpu_custom_call.1} parent=1 // pred_region
      _
    $region29: #{tpu_custom_call.1} parent=1 // pred_fallthru
      _
    // Predicated region
    $region30: #{tpu_custom_call.1} parent=1 // pred_check
      _
    $region31: #{tpu_custom_call.1} parent=1 // pred_check_branch
      %72 = sbr.rel (0) target = $region33
    $region32: #{tpu_custom_call.1} parent=1 // pred_region
      _
    $region33: #{tpu_custom_call.1} parent=1 // pred_fallthru
      _
    // Predicated region
    $region34: #{tpu_custom_call.1} parent=1 // pred_check
      _
    $region35: #{tpu_custom_call.1} parent=1 // pred_check_branch
      %74 = sbr.rel (0) target = $region37
    $region36: #{tpu_custom_call.1} parent=1 // pred_region
      _
    $region37: #{tpu_custom_call.1} parent=1 // pred_fallthru
      _
    // Predicated region
    $region38: #{tpu_custom_call.1} parent=1 // pred_check
      _
    $region39: #{tpu_custom_call.1} parent=1 // pred_check_branch
      %76 = sbr.rel (0) target = $region41
    $region40: #{tpu_custom_call.1} parent=1 // pred_region
      %77 = dma.done [#allocation4], 256
    $region41: #{tpu_custom_call.1} parent=1 // pred_fallthru
      _
    // Predicated region
    $region42: #{tpu_custom_call.1} parent=1 // pred_check
      _
    $region43: #{tpu_custom_call.1} parent=1 // pred_check_branch
      %79 = sbr.rel (0) target = $region45
    $region44: #{tpu_custom_call.1} parent=1 // pred_region
      %80 = dma.done [#allocation6], 1024
    $region45: #{tpu_custom_call.1} parent=1 // pred_fallthru
      _
    // Predicated region
    $region46: #{tpu_custom_call.1} parent=1 // pred_check
      _
    $region47: #{tpu_custom_call.1} parent=1 // pred_check_branch
      %82 = sbr.rel (0) target = $region49
    $region48: #{tpu_custom_call.1} parent=1 // pred_region
      %83 = dma.done [#allocation6], 1024
    $region49: #{tpu_custom_call.1} parent=1 // pred_fallthru
      _
    // Predicated region
    $region50: #{tpu_custom_call.1} parent=1 // pred_check
      _
    $region51: #{tpu_custom_call.1} parent=1 // pred_check_branch
      %85 = sbr.rel (0) target = $region53
    $region52: #{tpu_custom_call.1} parent=1 // pred_region
      %86 = dma.done [#allocation9], 1024
    $region53: #{tpu_custom_call.1} parent=1 // pred_fallthru
      _
    %v87 = vld [vmem:[#allocation5] sm:$0xff]
    %v88 = vld [vmem:[#allocation5 + $0x8] sm:$0xff]
    %v89 = vld [vmem:[#allocation5 + $0x10] sm:$0xff]
    %v90 = vld [vmem:[#allocation5 + $0x18] sm:$0xff]
    %v91 = vld [vmem:[#allocation5 + $0x20] sm:$0xff]
    %v92 = vld [vmem:[#allocation5 + $0x28] sm:$0xff]
    %v93 = vld [vmem:[#allocation5 + $0x30] sm:$0xff]
    %v94 = vld [vmem:[#allocation5 + $0x38] sm:$0xff]
    %v95 = vld [vmem:[#allocation7] sm:$0xff]
    %v96 = vld [vmem:[#allocation7 + $0x8] sm:$0xff]
    %v97 = vld [vmem:[#allocation7 + $0x10] sm:$0xff]
    %v98 = vld [vmem:[#allocation7 + $0x18] sm:$0xff]
    %v99 = vld [vmem:[#allocation7 + $0x20] sm:$0xff]
    %v100 = vld [vmem:[#allocation7 + $0x28] sm:$0xff]
    %v101 = vld [vmem:[#allocation7 + $0x30] sm:$0xff]
    %v102 = vld [vmem:[#allocation7 + $0x38] sm:$0xff]
    %v103 = vld [vmem:[#allocation8] sm:$0xff]
    %v104 = vld [vmem:[#allocation8 + $0x8] sm:$0xff]
    %v105 = vld [vmem:[#allocation8 + $0x10] sm:$0xff]
    %v106 = vld [vmem:[#allocation8 + $0x18] sm:$0xff]
    %v107 = vld [vmem:[#allocation8 + $0x20] sm:$0xff]
    %v108 = vld [vmem:[#allocation8 + $0x28] sm:$0xff]
    %v109 = vld [vmem:[#allocation8 + $0x30] sm:$0xff]
    %v110 = vld [vmem:[#allocation8 + $0x38] sm:$0xff]
    %v111 = vld [vmem:[%s6] sm:$0x1]
    %v113 = vlaneseq
    %v114 = vshrl.u32 %v113, 7
    %v115 = vsub.s32 0, %v114
    %v116 = vrot.slane %v111, %v115
    %v118 = vld [vmem:[%s0] sm:$0xff]
    %v119 = vld [vmem:[%s0 + $0x8] sm:$0xff]
    %v120 = vld [vmem:[%s0 + $0x10] sm:$0xff]
    %v121 = vld [vmem:[%s0 + $0x18] sm:$0xff]
    %v122 = vld [vmem:[%s0 + $0x20] sm:$0xff]
    %v123 = vld [vmem:[%s0 + $0x28] sm:$0xff]
    %v124 = vld [vmem:[%s0 + $0x30] sm:$0xff]
    %v125 = vld [vmem:[%s0 + $0x38] sm:$0xff]
    %v126 = vld [vmem:[#allocation3] sm:$0xff]
    %v127 = vld [vmem:[#allocation3 + $0x8] sm:$0xff]
    %v128 = vld [vmem:[%s2] sm:$0x1]
    %v130 = vlaneseq
    %v131 = vshrl.u32 %v130, 7
    %v132 = vsub.s32 0, %v131
    %v133 = vrot.slane %v128, %v132
    %vm135 = vcmask 130048
    %v137 = vsel %vm135, %v118, 0
    %v140 = vsel %vm135, %v119, 0
    %v143 = vsel %vm135, %v120, 0
    %v146 = vsel %vm135, %v121, 0
    %v149 = vsel %vm135, %v122, 0
    %v152 = vsel %vm135, %v123, 0
    %v155 = vsel %vm135, %v124, 0
    %v158 = vsel %vm135, %v125, 0
    %160 = vmatprep.subr.mxu0 0.0
    %161 = vmatpush1.msra.mxu0 %v126
    %162 = vmatprep.subr.mxu0 0.0
    %163 = vmatpush1.msra.mxu0 %v127
    %164 = vmatprep.subr.mxu0 0.0
    %165 = vmatpush1.msra.mxu0 0.0
    %166 = vmatprep.subr.mxu0 0.0
    %167 = vmatpush1.msra.mxu0 0.0
    %168 = vmatprep.subr.mxu0 0.0
    %169 = vmatpush1.msra.mxu0 0.0
    %170 = vmatprep.subr.mxu0 0.0
    %171 = vmatpush1.msra.mxu0 0.0
    %172 = vmatprep.subr.mxu0 0.0
    %173 = vmatpush1.msra.mxu0 0.0
    %174 = vmatprep.subr.mxu0 0.0
    %175 = vmatpush1.msra.mxu0 0.0
    %176 = vmatprep.subr.mxu0 0.0
    %177 = vmatpush1.msra.mxu0 0.0
    %178 = vmatprep.subr.mxu0 0.0
    %179 = vmatpush1.msra.mxu0 0.0
    %180 = vmatprep.subr.mxu0 0.0
    %181 = vmatpush1.msra.mxu0 0.0
    %182 = vmatprep.subr.mxu0 0.0
    %183 = vmatpush1.msra.mxu0 0.0
    %184 = vmatprep.subr.mxu0 0.0
    %185 = vmatpush1.msra.mxu0 0.0
    %186 = vmatprep.subr.mxu0 0.0
    %187 = vmatpush1.msra.mxu0 0.0
    %188 = vmatprep.subr.mxu0 0.0
    %189 = vmatpush1.msra.mxu0 0.0
    %190 = vmatprep.subr.mxu0 0.0
    %191 = vmatpush1.msra.mxu0 0.0
    %192 = vmatprep.subr.mxu0 0.0
    %193 = vmatpush1.msra.mxu0 0.0
    %194 = vmatprep.subr.mxu0 0.0
    %195 = vmatpush1.msra.mxu0 0.0
    %196 = vmatprep.subr.mxu0 0.0
    %197 = vmatpush1.msra.mxu0 0.0
    %198 = vmatprep.subr.mxu0 0.0
    %199 = vmatpush1.msra.mxu0 0.0
    %200 = vmatprep.subr.mxu0 0.0
    %201 = vmatpush1.msra.mxu0 0.0
    %202 = vmatprep.subr.mxu0 0.0
    %203 = vmatpush1.msra.mxu0 0.0
    %204 = vmatprep.subr.mxu0 0.0
    %205 = vmatpush1.msra.mxu0 0.0
    %206 = vmatprep.subr.mxu0 0.0
    %207 = vmatpush1.msra.mxu0 0.0
    %208 = vmatprep.subr.mxu0 0.0
    %209 = vmatpush1.msra.mxu0 0.0
    %210 = vmatprep.subr.mxu0 0.0
    %211 = vmatpush1.msra.mxu0 0.0
    %212 = vmatprep.subr.mxu0 0.0
    %213 = vmatpush1.msra.mxu0 0.0
    %214 = vmatprep.subr.mxu0 0.0
    %215 = vmatpush1.msra.mxu0 0.0
    %216 = vmatprep.subr.mxu0 0.0
    %217 = vmatpush1.msra.mxu0 0.0
    %218 = vmatprep.subr.mxu0 0.0
    %219 = vmatpush1.msra.mxu0 0.0
    %220 = vmatprep.subr.mxu0 0.0
    %221 = vmatpush1.msra.mxu0 0.0
    %222 = vmatprep.subr.mxu0 0.0
    %223 = vmatpush1.msra.mxu0 0.0
    %224 = vmatprep.mubr.f32.mxu0 0.0
    %225 = vmatmul.mubr.f32.gmra.mrb[0].mxu0 %v137
    %v226 = vpop.f32.mrb[0].mxu0
    %v227 = vadd.f32 %v133, %v226
    %v228 = vpop.f32.mrb[0].mxu0
    %229 = vmatprep.mubr.f32.mxu0 0.0
    %230 = vmatmul.mubr.f32.gmra.mrb[0].mxu0 %v140
    %v231 = vpop.f32.mrb[0].mxu0
    %v232 = vadd.f32 %v133, %v231
    %v233 = vpop.f32.mrb[0].mxu0
    %234 = vmatprep.mubr.f32.mxu0 0.0
    %235 = vmatmul.mubr.f32.gmra.mrb[0].mxu0 %v143
    %v236 = vpop.f32.mrb[0].mxu0
    %v237 = vadd.f32 %v133, %v236
    %v238 = vpop.f32.mrb[0].mxu0
    %239 = vmatprep.mubr.f32.mxu0 0.0
    %240 = vmatmul.mubr.f32.gmra.mrb[0].mxu0 %v146
    %v241 = vpop.f32.mrb[0].mxu0
    %v242 = vadd.f32 %v133, %v241
    %v243 = vpop.f32.mrb[0].mxu0
    %244 = vmatprep.mubr.f32.mxu0 0.0
    %245 = vmatmul.mubr.f32.gmra.mrb[0].mxu0 %v149
    %v246 = vpop.f32.mrb[0].mxu0
    %v247 = vadd.f32 %v133, %v246
    %v248 = vpop.f32.mrb[0].mxu0
    %249 = vmatprep.mubr.f32.mxu0 0.0
    %250 = vmatmul.mubr.f32.gmra.mrb[0].mxu0 %v152
    %v251 = vpop.f32.mrb[0].mxu0
    %v252 = vadd.f32 %v133, %v251
    %v253 = vpop.f32.mrb[0].mxu0
    %254 = vmatprep.mubr.f32.mxu0 0.0
    %255 = vmatmul.mubr.f32.gmra.mrb[0].mxu0 %v155
    %v256 = vpop.f32.mrb[0].mxu0
    %v257 = vadd.f32 %v133, %v256
    %v258 = vpop.f32.mrb[0].mxu0
    %259 = vmatprep.mubr.f32.mxu0 0.0
    %260 = vmatmul.mubr.f32.gmra.mrb[0].mxu0 %v158
    %v261 = vpop.f32.mrb[0].mxu0
    %v262 = vadd.f32 %v133, %v261
    %v263 = vpop.f32.mrb[0].mxu0
    %264 = vdwg.mxu0
    %v273 = vrot.slane %v232, 7
    %vm274 = vcmask 1041409
    %v275 = vsel %vm274, %v273, %v227
    %v276 = vrot.slane %v237, 6
    %vm277 = vcmask 1042434
    %v278 = vsel %vm277, %v276, %v275
    %v279 = vrot.slane %v242, 5
    %vm280 = vcmask 1043459
    %v281 = vsel %vm280, %v279, %v278
    %v282 = vrot.slane %v247, 4
    %vm283 = vcmask 1044484
    %v284 = vsel %vm283, %v282, %v281
    %v285 = vrot.slane %v252, 3
    %vm286 = vcmask 1045509
    %v287 = vsel %vm286, %v285, %v284
    %v288 = vrot.slane %v257, 2
    %vm289 = vcmask 1046534
    %v290 = vsel %vm289, %v288, %v287
    %v291 = vrot.slane %v262, 1
    %vm292 = vcmask 1047559
    %v293 = vsel %vm292, %v291, %v290
    %vm295 = vcmask 523264
    %296 = vst.msk [vmem:[#allocation2] sm:$0xff] %vm295, %v293
    %v297 = vsel %vm277, %v273, %v227
    %v298 = vsel %vm280, %v276, %v297
    %v299 = vsel %vm283, %v279, %v298
    %v300 = vsel %vm286, %v282, %v299
    %v301 = vsel %vm289, %v285, %v300
    %v302 = vsel %vm292, %v288, %v301
    %s305 = scalar_lea.vmem [#allocation2], 8
    %vm306 = vcmask 523265
    %307 = vst.msk [vmem:[%s305 - $0x1] sm:$0xfe] %vm306, %v302
    %vm308 = vcmask 516096
    %309 = vst.msk [vmem:[%s305 + $0x7] sm:$0x1] %vm308, %v291
    %v310 = vsel %vm280, %v273, %v227
    %v311 = vsel %vm283, %v276, %v310
    %v312 = vsel %vm286, %v279, %v311
    %v313 = vsel %vm289, %v282, %v312
    %v314 = vsel %vm292, %v285, %v313
    %v315 = vsel %vm274, %v291, %v288
    %s318 = scalar_lea.vmem [#allocation2], 16
    %vm319 = vcmask 523266
    %320 = vst.msk [vmem:[%s318 - $0x2] sm:$0xfc] %vm319, %v314
    %vm321 = vcmask 517120
    %322 = vst.msk [vmem:[%s318 + $0x6] sm:$0x3] %vm321, %v315
    %v323 = vsel %vm283, %v273, %v227
    %v324 = vsel %vm286, %v276, %v323
    %v325 = vsel %vm289, %v279, %v324
    %v326 = vsel %vm292, %v282, %v325
    %v327 = vsel %vm274, %v288, %v285
    %v328 = vsel %vm277, %v291, %v327
    %s331 = scalar_lea.vmem [#allocation2], 24
    %vm332 = vcmask 523267
    %333 = vst.msk [vmem:[%s331 - $0x3] sm:$0xf8] %vm332, %v326
    %vm334 = vcmask 518144
    %335 = vst.msk [vmem:[%s331 + $0x5] sm:$0x7] %vm334, %v328
    %v336 = vsel %vm286, %v273, %v227
    %v337 = vsel %vm289, %v276, %v336
    %v338 = vsel %vm292, %v279, %v337
    %v339 = vsel %vm274, %v285, %v282
    %v340 = vsel %vm277, %v288, %v339
    %v341 = vsel %vm280, %v291, %v340
    %s344 = scalar_lea.vmem [#allocation2], 32
    %vm345 = vcmask 523268
    %346 = vst.msk [vmem:[%s344 - $0x4] sm:$0xf0] %vm345, %v338
    %vm347 = vcmask 519168
    %348 = vst.msk [vmem:[%s344 + $0x4] sm:$0xf] %vm347, %v341
    %v349 = vsel %vm289, %v273, %v227
    %v350 = vsel %vm292, %v276, %v349
    %v351 = vsel %vm274, %v282, %v279
    %v352 = vsel %vm277, %v285, %v351
    %v353 = vsel %vm280, %v288, %v352
    %v354 = vsel %vm283, %v291, %v353
    %s357 = scalar_lea.vmem [#allocation2], 40
    %vm358 = vcmask 523269
    %359 = vst.msk [vmem:[%s357 - $0x5] sm:$0xe0] %vm358, %v350
    %vm360 = vcmask 520192
    %361 = vst.msk [vmem:[%s357 + $0x3] sm:$0x1f] %vm360, %v354
    %v362 = vsel %vm292, %v273, %v227
    %v363 = vsel %vm274, %v279, %v276
    %v364 = vsel %vm277, %v282, %v363
    %v365 = vsel %vm280, %v285, %v364
    %v366 = vsel %vm283, %v288, %v365
    %v367 = vsel %vm286, %v291, %v366
    %s370 = scalar_lea.vmem [#allocation2], 48
    %vm371 = vcmask 523270
    %372 = vst.msk [vmem:[%s370 - $0x6] sm:$0xc0] %vm371, %v362
    %vm373 = vcmask 521216
    %374 = vst.msk [vmem:[%s370 + $0x2] sm:$0x3f] %vm373, %v367
    %v375 = vsel %vm274, %v276, %v273
    %v376 = vsel %vm277, %v279, %v375
    %v377 = vsel %vm280, %v282, %v376
    %v378 = vsel %vm283, %v285, %v377
    %v379 = vsel %vm286, %v288, %v378
    %v380 = vsel %vm289, %v291, %v379
    %s383 = scalar_lea.vmem [#allocation2], 56
    %vm384 = vcmask 523271
    %385 = vst.msk [vmem:[%s383 - $0x7] sm:$0x80] %vm384, %v227
    %vm386 = vcmask 522240
    %387 = vst.msk [vmem:[%s383 + $0x1] sm:$0x7f] %vm386, %v380
    %v389 = vsel %vm295, 0.0, 0
    %391 = vmatprep.subr.mxu0 0.0
    %392 = vmatpush1.msra.mxu0 %v103
    %393 = vmatprep.subr.mxu0 0.0
    %394 = vmatpush1.msra.mxu0 %v104
    %395 = vmatprep.subr.mxu0 0.0
    %396 = vmatpush1.msra.mxu0 %v105
    %397 = vmatprep.subr.mxu0 0.0
    %398 = vmatpush1.msra.mxu0 %v106
    %399 = vmatprep.subr.mxu0 0.0
    %400 = vmatpush1.msra.mxu0 %v107
    %401 = vmatprep.subr.mxu0 0.0
    %402 = vmatpush1.msra.mxu0 %v108
    %403 = vmatprep.subr.mxu0 0.0
    %404 = vmatpush1.msra.mxu0 %v109
    %405 = vmatprep.subr.mxu0 0.0
    %406 = vmatpush1.msra.mxu0 %v110
    %407 = vmatprep.subr.mxu0 0.0
    %408 = vmatpush1.msra.mxu0 0.0
    %409 = vmatprep.subr.mxu0 0.0
    %410 = vmatpush1.msra.mxu0 0.0
    %411 = vmatprep.subr.mxu0 0.0
    %412 = vmatpush1.msra.mxu0 0.0
    %413 = vmatprep.subr.mxu0 0.0
    %414 = vmatpush1.msra.mxu0 0.0
    %415 = vmatprep.subr.mxu0 0.0
    %416 = vmatpush1.msra.mxu0 0.0
    %417 = vmatprep.subr.mxu0 0.0
    %418 = vmatpush1.msra.mxu0 0.0
    %419 = vmatprep.subr.mxu0 0.0
    %420 = vmatpush1.msra.mxu0 0.0
    %421 = vmatprep.subr.mxu0 0.0
    %422 = vmatpush1.msra.mxu0 0.0
    %423 = vmatprep.subr.mxu0 0.0
    %424 = vmatpush1.msra.mxu0 0.0
    %425 = vmatprep.subr.mxu0 0.0
    %426 = vmatpush1.msra.mxu0 0.0
    %427 = vmatprep.subr.mxu0 0.0
    %428 = vmatpush1.msra.mxu0 0.0
    %429 = vmatprep.subr.mxu0 0.0
    %430 = vmatpush1.msra.mxu0 0.0
    %431 = vmatprep.subr.mxu0 0.0
    %432 = vmatpush1.msra.mxu0 0.0
    %433 = vmatprep.subr.mxu0 0.0
    %434 = vmatpush1.msra.mxu0 0.0
    %435 = vmatprep.subr.mxu0 0.0
    %436 = vmatpush1.msra.mxu0 0.0
    %437 = vmatprep.subr.mxu0 0.0
    %438 = vmatpush1.msra.mxu0 0.0
    %439 = vmatprep.subr.mxu0 0.0
    %440 = vmatpush1.msra.mxu0 0.0
    %441 = vmatprep.subr.mxu0 0.0
    %442 = vmatpush1.msra.mxu0 0.0
    %443 = vmatprep.subr.mxu0 0.0
    %444 = vmatpush1.msra.mxu0 0.0
    %445 = vmatprep.subr.mxu0 0.0
    %446 = vmatpush1.msra.mxu0 0.0
    %447 = vmatprep.subr.mxu0 0.0
    %448 = vmatpush1.msra.mxu0 0.0
    %449 = vmatprep.subr.mxu0 0.0
    %450 = vmatpush1.msra.mxu0 0.0
    %451 = vmatprep.subr.mxu0 0.0
    %452 = vmatpush1.msra.mxu0 0.0
    %453 = vmatprep.subr.mxu0 0.0
    %454 = vmatpush1.msra.mxu0 0.0
    %455 = vmatprep.mubr.f32.mxu0 0.0
    %456 = vmatmul.mubr.f32.gmra.mrb[0].mxu0 %v389
    %v457 = vpop.f32.mrb[0].mxu0
    %v458 = vadd.f32 0.0, %v457
    %v459 = vpop.f32.mrb[0].mxu0
    %460 = vdwg.mxu0
    %461 = vmatprep.subr.mxu0 0.0
    %462 = vmatpush1.msra.mxu0 %v87
    %463 = vmatprep.subr.mxu0 0.0
    %464 = vmatpush1.msra.mxu0 %v88
    %465 = vmatprep.subr.mxu0 0.0
    %466 = vmatpush1.msra.mxu0 %v89
    %467 = vmatprep.subr.mxu0 0.0
    %468 = vmatpush1.msra.mxu0 %v90
    %469 = vmatprep.subr.mxu0 0.0
    %470 = vmatpush1.msra.mxu0 %v91
    %471 = vmatprep.subr.mxu0 0.0
    %472 = vmatpush1.msra.mxu0 %v92
    %473 = vmatprep.subr.mxu0 0.0
    %474 = vmatpush1.msra.mxu0 %v93
    %475 = vmatprep.subr.mxu0 0.0
    %476 = vmatpush1.msra.mxu0 %v94
    %477 = vmatprep.subr.mxu0 0.0
    %478 = vmatpush1.msra.mxu0 0.0
    %479 = vmatprep.subr.mxu0 0.0
    %480 = vmatpush1.msra.mxu0 0.0
    %481 = vmatprep.subr.mxu0 0.0
    %482 = vmatpush1.msra.mxu0 0.0
    %483 = vmatprep.subr.mxu0 0.0
    %484 = vmatpush1.msra.mxu0 0.0
    %485 = vmatprep.subr.mxu0 0.0
    %486 = vmatpush1.msra.mxu0 0.0
    %487 = vmatprep.subr.mxu0 0.0
    %488 = vmatpush1.msra.mxu0 0.0
    %489 = vmatprep.subr.mxu0 0.0
    %490 = vmatpush1.msra.mxu0 0.0
    %491 = vmatprep.subr.mxu0 0.0
    %492 = vmatpush1.msra.mxu0 0.0
    %493 = vmatprep.subr.mxu0 0.0
    %494 = vmatpush1.msra.mxu0 0.0
    %495 = vmatprep.subr.mxu0 0.0
    %496 = vmatpush1.msra.mxu0 0.0
    %497 = vmatprep.subr.mxu0 0.0
    %498 = vmatpush1.msra.mxu0 0.0
    %499 = vmatprep.subr.mxu0 0.0
    %500 = vmatpush1.msra.mxu0 0.0
    %501 = vmatprep.subr.mxu0 0.0
    %502 = vmatpush1.msra.mxu0 0.0
    %503 = vmatprep.subr.mxu0 0.0
    %504 = vmatpush1.msra.mxu0 0.0
    %505 = vmatprep.subr.mxu0 0.0
    %506 = vmatpush1.msra.mxu0 0.0
    %507 = vmatprep.subr.mxu0 0.0
    %508 = vmatpush1.msra.mxu0 0.0
    %509 = vmatprep.subr.mxu0 0.0
    %510 = vmatpush1.msra.mxu0 0.0
    %511 = vmatprep.subr.mxu0 0.0
    %512 = vmatpush1.msra.mxu0 0.0
    %513 = vmatprep.subr.mxu0 0.0
    %514 = vmatpush1.msra.mxu0 0.0
    %515 = vmatprep.subr.mxu0 0.0
    %516 = vmatpush1.msra.mxu0 0.0
    %517 = vmatprep.subr.mxu0 0.0
    %518 = vmatpush1.msra.mxu0 0.0
    %519 = vmatprep.subr.mxu0 0.0
    %520 = vmatpush1.msra.mxu0 0.0
    %521 = vmatprep.subr.mxu0 0.0
    %522 = vmatpush1.msra.mxu0 0.0
    %523 = vmatprep.subr.mxu0 0.0
    %524 = vmatpush1.msra.mxu0 0.0
    %525 = vmatprep.mubr.f32.mxu0 0.0
    %526 = vmatmul.mubr.f32.gmra.mrb[0].mxu0 %v389
    %v527 = vpop.f32.mrb[0].mxu0
    %v528 = vadd.f32 0.0, %v527
    %v529 = vpop.f32.mrb[0].mxu0
    %530 = vdwg.mxu0
    %v531 = vld [vmem:[#allocation2] sm:$0xff]
    %v532 = vadd.f32 %v531, %v528
    %v533 = vtanh.pop %v532
    %v535 = vsel %vm295, %v533, 0
    %537 = vmatprep.subr.mxu0 0.0
    %538 = vmatpush1.msra.mxu0 %v95
    %539 = vmatprep.subr.mxu0 0.0
    %540 = vmatpush1.msra.mxu0 %v96
    %541 = vmatprep.subr.mxu0 0.0
    %542 = vmatpush1.msra.mxu0 %v97
    %543 = vmatprep.subr.mxu0 0.0
    %544 = vmatpush1.msra.mxu0 %v98
    %545 = vmatprep.subr.mxu0 0.0
    %546 = vmatpush1.msra.mxu0 %v99
    %547 = vmatprep.subr.mxu0 0.0
    %548 = vmatpush1.msra.mxu0 %v100
    %549 = vmatprep.subr.mxu0 0.0
    %550 = vmatpush1.msra.mxu0 %v101
    %551 = vmatprep.subr.mxu0 0.0
    %552 = vmatpush1.msra.mxu0 %v102
    %553 = vmatprep.subr.mxu0 0.0
    %554 = vmatpush1.msra.mxu0 0.0
    %555 = vmatprep.subr.mxu0 0.0
    %556 = vmatpush1.msra.mxu0 0.0
    %557 = vmatprep.subr.mxu0 0.0
    %558 = vmatpush1.msra.mxu0 0.0
    %559 = vmatprep.subr.mxu0 0.0
    %560 = vmatpush1.msra.mxu0 0.0
    %561 = vmatprep.subr.mxu0 0.0
    %562 = vmatpush1.msra.mxu0 0.0
    %563 = vmatprep.subr.mxu0 0.0
    %564 = vmatpush1.msra.mxu0 0.0
    %565 = vmatprep.subr.mxu0 0.0
    %566 = vmatpush1.msra.mxu0 0.0
    %567 = vmatprep.subr.mxu0 0.0
    %568 = vmatpush1.msra.mxu0 0.0
    %569 = vmatprep.subr.mxu0 0.0
    %570 = vmatpush1.msra.mxu0 0.0
    %571 = vmatprep.subr.mxu0 0.0
    %572 = vmatpush1.msra.mxu0 0.0
    %573 = vmatprep.subr.mxu0 0.0
    %574 = vmatpush1.msra.mxu0 0.0
    %575 = vmatprep.subr.mxu0 0.0
    %576 = vmatpush1.msra.mxu0 0.0
    %577 = vmatprep.subr.mxu0 0.0
    %578 = vmatpush1.msra.mxu0 0.0
    %579 = vmatprep.subr.mxu0 0.0
    %580 = vmatpush1.msra.mxu0 0.0
    %581 = vmatprep.subr.mxu0 0.0
    %582 = vmatpush1.msra.mxu0 0.0
    %583 = vmatprep.subr.mxu0 0.0
    %584 = vmatpush1.msra.mxu0 0.0
    %585 = vmatprep.subr.mxu0 0.0
    %586 = vmatpush1.msra.mxu0 0.0
    %587 = vmatprep.subr.mxu0 0.0
    %588 = vmatpush1.msra.mxu0 0.0
    %589 = vmatprep.subr.mxu0 0.0
    %590 = vmatpush1.msra.mxu0 0.0
    %591 = vmatprep.subr.mxu0 0.0
    %592 = vmatpush1.msra.mxu0 0.0
    %593 = vmatprep.subr.mxu0 0.0
    %594 = vmatpush1.msra.mxu0 0.0
    %595 = vmatprep.subr.mxu0 0.0
    %596 = vmatpush1.msra.mxu0 0.0
    %597 = vmatprep.subr.mxu0 0.0
    %598 = vmatpush1.msra.mxu0 0.0
    %599 = vmatprep.subr.mxu0 0.0
    %600 = vmatpush1.msra.mxu0 0.0
    %601 = vmatprep.mubr.f32.mxu0 0.0
    %602 = vmatmul.mubr.f32.gmra.mrb[0].mxu0 %v535
    %v603 = vpop.f32.mrb[0].mxu0
    %v604 = vadd.f32 %v458, %v603
    %v605 = vpop.f32.mrb[0].mxu0
    %606 = vdwg.mxu0
    %v607 = vadd.f32 %v604, %v116
    %v608 = vtanh.pop %v607
    %v610 = vsel %vm295, %v608, 0
    %612 = vmatprep.subr.mxu0 0.0
    %613 = vmatpush1.msra.mxu0 %v103
    %614 = vmatprep.subr.mxu0 0.0
    %615 = vmatpush1.msra.mxu0 %v104
    %616 = vmatprep.subr.mxu0 0.0
    %617 = vmatpush1.msra.mxu0 %v105
    %618 = vmatprep.subr.mxu0 0.0
    %619 = vmatpush1.msra.mxu0 %v106
    %620 = vmatprep.subr.mxu0 0.0
    %621 = vmatpush1.msra.mxu0 %v107
    %622 = vmatprep.subr.mxu0 0.0
    %623 = vmatpush1.msra.mxu0 %v108
    %624 = vmatprep.subr.mxu0 0.0
    %625 = vmatpush1.msra.mxu0 %v109
    %626 = vmatprep.subr.mxu0 0.0
    %627 = vmatpush1.msra.mxu0 %v110
    %628 = vmatprep.subr.mxu0 0.0
    %629 = vmatpush1.msra.mxu0 0.0
    %630 = vmatprep.subr.mxu0 0.0
    %631 = vmatpush1.msra.mxu0 0.0
    %632 = vmatprep.subr.mxu0 0.0
    %633 = vmatpush1.msra.mxu0 0.0
    %634 = vmatprep.subr.mxu0 0.0
    %635 = vmatpush1.msra.mxu0 0.0
    %636 = vmatprep.subr.mxu0 0.0
    %637 = vmatpush1.msra.mxu0 0.0
    %638 = vmatprep.subr.mxu0 0.0
    %639 = vmatpush1.msra.mxu0 0.0
    %640 = vmatprep.subr.mxu0 0.0
    %641 = vmatpush1.msra.mxu0 0.0
    %642 = vmatprep.subr.mxu0 0.0
    %643 = vmatpush1.msra.mxu0 0.0
    %644 = vmatprep.subr.mxu0 0.0
    %645 = vmatpush1.msra.mxu0 0.0
    %646 = vmatprep.subr.mxu0 0.0
    %647 = vmatpush1.msra.mxu0 0.0
    %648 = vmatprep.subr.mxu0 0.0
    %649 = vmatpush1.msra.mxu0 0.0
    %650 = vmatprep.subr.mxu0 0.0
    %651 = vmatpush1.msra.mxu0 0.0
    %652 = vmatprep.subr.mxu0 0.0
    %653 = vmatpush1.msra.mxu0 0.0
    %654 = vmatprep.subr.mxu0 0.0
    %655 = vmatpush1.msra.mxu0 0.0
    %656 = vmatprep.subr.mxu0 0.0
    %657 = vmatpush1.msra.mxu0 0.0
    %658 = vmatprep.subr.mxu0 0.0
    %659 = vmatpush1.msra.mxu0 0.0
    %660 = vmatprep.subr.mxu0 0.0
    %661 = vmatpush1.msra.mxu0 0.0
    %662 = vmatprep.subr.mxu0 0.0
    %663 = vmatpush1.msra.mxu0 0.0
    %664 = vmatprep.subr.mxu0 0.0
    %665 = vmatpush1.msra.mxu0 0.0
    %666 = vmatprep.subr.mxu0 0.0
    %667 = vmatpush1.msra.mxu0 0.0
    %668 = vmatprep.subr.mxu0 0.0
    %669 = vmatpush1.msra.mxu0 0.0
    %670 = vmatprep.subr.mxu0 0.0
    %671 = vmatpush1.msra.mxu0 0.0
    %672 = vmatprep.subr.mxu0 0.0
    %673 = vmatpush1.msra.mxu0 0.0
    %674 = vmatprep.subr.mxu0 0.0
    %675 = vmatpush1.msra.mxu0 0.0
    %676 = vmatprep.mubr.f32.mxu0 0.0
    %677 = vmatmul.mubr.f32.gmra.mrb[0].mxu0 %v610
    %v678 = vpop.f32.mrb[0].mxu0
    %v679 = vadd.f32 0.0, %v678
    %v680 = vpop.f32.mrb[0].mxu0
    %681 = vdwg.mxu0
    %682 = vmatprep.subr.mxu0 0.0
    %683 = vmatpush1.msra.mxu0 %v87
    %684 = vmatprep.subr.mxu0 0.0
    %685 = vmatpush1.msra.mxu0 %v88
    %686 = vmatprep.subr.mxu0 0.0
    %687 = vmatpush1.msra.mxu0 %v89
    %688 = vmatprep.subr.mxu0 0.0
    %689 = vmatpush1.msra.mxu0 %v90
    %690 = vmatprep.subr.mxu0 0.0
    %691 = vmatpush1.msra.mxu0 %v91
    %692 = vmatprep.subr.mxu0 0.0
    %693 = vmatpush1.msra.mxu0 %v92
    %694 = vmatprep.subr.mxu0 0.0
    %695 = vmatpush1.msra.mxu0 %v93
    %696 = vmatprep.subr.mxu0 0.0
    %697 = vmatpush1.msra.mxu0 %v94
    %698 = vmatprep.subr.mxu0 0.0
    %699 = vmatpush1.msra.mxu0 0.0
    %700 = vmatprep.subr.mxu0 0.0
    %701 = vmatpush1.msra.mxu0 0.0
    %702 = vmatprep.subr.mxu0 0.0
    %703 = vmatpush1.msra.mxu0 0.0
    %704 = vmatprep.subr.mxu0 0.0
    %705 = vmatpush1.msra.mxu0 0.0
    %706 = vmatprep.subr.mxu0 0.0
    %707 = vmatpush1.msra.mxu0 0.0
    %708 = vmatprep.subr.mxu0 0.0
    %709 = vmatpush1.msra.mxu0 0.0
    %710 = vmatprep.subr.mxu0 0.0
    %711 = vmatpush1.msra.mxu0 0.0
    %712 = vmatprep.subr.mxu0 0.0
    %713 = vmatpush1.msra.mxu0 0.0
    %714 = vmatprep.subr.mxu0 0.0
    %715 = vmatpush1.msra.mxu0 0.0
    %716 = vmatprep.subr.mxu0 0.0
    %717 = vmatpush1.msra.mxu0 0.0
    %718 = vmatprep.subr.mxu0 0.0
    %719 = vmatpush1.msra.mxu0 0.0
    %720 = vmatprep.subr.mxu0 0.0
    %721 = vmatpush1.msra.mxu0 0.0
    %722 = vmatprep.subr.mxu0 0.0
    %723 = vmatpush1.msra.mxu0 0.0
    %724 = vmatprep.subr.mxu0 0.0
    %725 = vmatpush1.msra.mxu0 0.0
    %726 = vmatprep.subr.mxu0 0.0
    %727 = vmatpush1.msra.mxu0 0.0
    %728 = vmatprep.subr.mxu0 0.0
    %729 = vmatpush1.msra.mxu0 0.0
    %730 = vmatprep.subr.mxu0 0.0
    %731 = vmatpush1.msra.mxu0 0.0
    %732 = vmatprep.subr.mxu0 0.0
    %733 = vmatpush1.msra.mxu0 0.0
    %734 = vmatprep.subr.mxu0 0.0
    %735 = vmatpush1.msra.mxu0 0.0
    %736 = vmatprep.subr.mxu0 0.0
    %737 = vmatpush1.msra.mxu0 0.0
    %738 = vmatprep.subr.mxu0 0.0
    %739 = vmatpush1.msra.mxu0 0.0
    %740 = vmatprep.subr.mxu0 0.0
    %741 = vmatpush1.msra.mxu0 0.0
    %742 = vmatprep.subr.mxu0 0.0
    %743 = vmatpush1.msra.mxu0 0.0
    %744 = vmatprep.subr.mxu0 0.0
    %745 = vmatpush1.msra.mxu0 0.0
    %746 = vmatprep.mubr.f32.mxu0 0.0
    %747 = vmatmul.mubr.f32.gmra.mrb[0].mxu0 %v535
    %v748 = vpop.f32.mrb[0].mxu0
    %v749 = vadd.f32 0.0, %v748
    %v750 = vpop.f32.mrb[0].mxu0
    %751 = vdwg.mxu0
    %v752 = vld [vmem:[%s305] sm:$0xff]
    %v753 = vadd.f32 %v752, %v749
    %v754 = vtanh.pop %v753
    %v756 = vsel %vm295, %v754, 0
    %758 = vmatprep.subr.mxu0 0.0
    %759 = vmatpush1.msra.mxu0 %v95
    %760 = vmatprep.subr.mxu0 0.0
    %761 = vmatpush1.msra.mxu0 %v96
    %762 = vmatprep.subr.mxu0 0.0
    %763 = vmatpush1.msra.mxu0 %v97
    %764 = vmatprep.subr.mxu0 0.0
    %765 = vmatpush1.msra.mxu0 %v98
    %766 = vmatprep.subr.mxu0 0.0
    %767 = vmatpush1.msra.mxu0 %v99
    %768 = vmatprep.subr.mxu0 0.0
    %769 = vmatpush1.msra.mxu0 %v100
    %770 = vmatprep.subr.mxu0 0.0
    %771 = vmatpush1.msra.mxu0 %v101
    %772 = vmatprep.subr.mxu0 0.0
    %773 = vmatpush1.msra.mxu0 %v102
    %774 = vmatprep.subr.mxu0 0.0
    %775 = vmatpush1.msra.mxu0 0.0
    %776 = vmatprep.subr.mxu0 0.0
    %777 = vmatpush1.msra.mxu0 0.0
    %778 = vmatprep.subr.mxu0 0.0
    %779 = vmatpush1.msra.mxu0 0.0
    %780 = vmatprep.subr.mxu0 0.0
    %781 = vmatpush1.msra.mxu0 0.0
    %782 = vmatprep.subr.mxu0 0.0
    %783 = vmatpush1.msra.mxu0 0.0
    %784 = vmatprep.subr.mxu0 0.0
    %785 = vmatpush1.msra.mxu0 0.0
    %786 = vmatprep.subr.mxu0 0.0
    %787 = vmatpush1.msra.mxu0 0.0
    %788 = vmatprep.subr.mxu0 0.0
    %789 = vmatpush1.msra.mxu0 0.0
    %790 = vmatprep.subr.mxu0 0.0
    %791 = vmatpush1.msra.mxu0 0.0
    %792 = vmatprep.subr.mxu0 0.0
    %793 = vmatpush1.msra.mxu0 0.0
    %794 = vmatprep.subr.mxu0 0.0
    %795 = vmatpush1.msra.mxu0 0.0
    %796 = vmatprep.subr.mxu0 0.0
    %797 = vmatpush1.msra.mxu0 0.0
    %798 = vmatprep.subr.mxu0 0.0
    %799 = vmatpush1.msra.mxu0 0.0
    %800 = vmatprep.subr.mxu0 0.0
    %801 = vmatpush1.msra.mxu0 0.0
    %802 = vmatprep.subr.mxu0 0.0
    %803 = vmatpush1.msra.mxu0 0.0
    %804 = vmatprep.subr.mxu0 0.0
    %805 = vmatpush1.msra.mxu0 0.0
    %806 = vmatprep.subr.mxu0 0.0
    %807 = vmatpush1.msra.mxu0 0.0
    %808 = vmatprep.subr.mxu0 0.0
    %809 = vmatpush1.msra.mxu0 0.0
    %810 = vmatprep.subr.mxu0 0.0
    %811 = vmatpush1.msra.mxu0 0.0
    %812 = vmatprep.subr.mxu0 0.0
    %813 = vmatpush1.msra.mxu0 0.0
    %814 = vmatprep.subr.mxu0 0.0
    %815 = vmatpush1.msra.mxu0 0.0
    %816 = vmatprep.subr.mxu0 0.0
    %817 = vmatpush1.msra.mxu0 0.0
    %818 = vmatprep.subr.mxu0 0.0
    %819 = vmatpush1.msra.mxu0 0.0
    %820 = vmatprep.subr.mxu0 0.0
    %821 = vmatpush1.msra.mxu0 0.0
    %822 = vmatprep.mubr.f32.mxu0 0.0
    %823 = vmatmul.mubr.f32.gmra.mrb[0].mxu0 %v756
    %v824 = vpop.f32.mrb[0].mxu0
    %v825 = vadd.f32 %v679, %v824
    %v826 = vpop.f32.mrb[0].mxu0
    %827 = vdwg.mxu0
    %v828 = vadd.f32 %v825, %v116
    %v829 = vtanh.pop %v828
    %v831 = vsel %vm295, %v829, 0
    %833 = vmatprep.subr.mxu0 0.0
    %834 = vmatpush1.msra.mxu0 %v103
    %835 = vmatprep.subr.mxu0 0.0
    %836 = vmatpush1.msra.mxu0 %v104
    %837 = vmatprep.subr.mxu0 0.0
    %838 = vmatpush1.msra.mxu0 %v105
    %839 = vmatprep.subr.mxu0 0.0
    %840 = vmatpush1.msra.mxu0 %v106
    %841 = vmatprep.subr.mxu0 0.0
    %842 = vmatpush1.msra.mxu0 %v107
    %843 = vmatprep.subr.mxu0 0.0
    %844 = vmatpush1.msra.mxu0 %v108
    %845 = vmatprep.subr.mxu0 0.0
    %846 = vmatpush1.msra.mxu0 %v109
    %847 = vmatprep.subr.mxu0 0.0
    %848 = vmatpush1.msra.mxu0 %v110
    %849 = vmatprep.subr.mxu0 0.0
    %850 = vmatpush1.msra.mxu0 0.0
    %851 = vmatprep.subr.mxu0 0.0
    %852 = vmatpush1.msra.mxu0 0.0
    %853 = vmatprep.subr.mxu0 0.0
    %854 = vmatpush1.msra.mxu0 0.0
    %855 = vmatprep.subr.mxu0 0.0
    %856 = vmatpush1.msra.mxu0 0.0
    %857 = vmatprep.subr.mxu0 0.0
    %858 = vmatpush1.msra.mxu0 0.0
    %859 = vmatprep.subr.mxu0 0.0
    %860 = vmatpush1.msra.mxu0 0.0
    %861 = vmatprep.subr.mxu0 0.0
    %862 = vmatpush1.msra.mxu0 0.0
    %863 = vmatprep.subr.mxu0 0.0
    %864 = vmatpush1.msra.mxu0 0.0
    %865 = vmatprep.subr.mxu0 0.0
    %866 = vmatpush1.msra.mxu0 0.0
    %867 = vmatprep.subr.mxu0 0.0
    %868 = vmatpush1.msra.mxu0 0.0
    %869 = vmatprep.subr.mxu0 0.0
    %870 = vmatpush1.msra.mxu0 0.0
    %871 = vmatprep.subr.mxu0 0.0
    %872 = vmatpush1.msra.mxu0 0.0
    %873 = vmatprep.subr.mxu0 0.0
    %874 = vmatpush1.msra.mxu0 0.0
    %875 = vmatprep.subr.mxu0 0.0
    %876 = vmatpush1.msra.mxu0 0.0
    %877 = vmatprep.subr.mxu0 0.0
    %878 = vmatpush1.msra.mxu0 0.0
    %879 = vmatprep.subr.mxu0 0.0
    %880 = vmatpush1.msra.mxu0 0.0
    %881 = vmatprep.subr.mxu0 0.0
    %882 = vmatpush1.msra.mxu0 0.0
    %883 = vmatprep.subr.mxu0 0.0
    %884 = vmatpush1.msra.mxu0 0.0
    %885 = vmatprep.subr.mxu0 0.0
    %886 = vmatpush1.msra.mxu0 0.0
    %887 = vmatprep.subr.mxu0 0.0
    %888 = vmatpush1.msra.mxu0 0.0
    %889 = vmatprep.subr.mxu0 0.0
    %890 = vmatpush1.msra.mxu0 0.0
    %891 = vmatprep.subr.mxu0 0.0
    %892 = vmatpush1.msra.mxu0 0.0
    %893 = vmatprep.subr.mxu0 0.0
    %894 = vmatpush1.msra.mxu0 0.0
    %895 = vmatprep.subr.mxu0 0.0
    %896 = vmatpush1.msra.mxu0 0.0
    %897 = vmatprep.mubr.f32.mxu0 0.0
    %898 = vmatmul.mubr.f32.gmra.mrb[0].mxu0 %v831
    %v899 = vpop.f32.mrb[0].mxu0
    %v900 = vadd.f32 0.0, %v899
    %v901 = vpop.f32.mrb[0].mxu0
    %902 = vdwg.mxu0
    %903 = vmatprep.subr.mxu0 0.0
    %904 = vmatpush1.msra.mxu0 %v87
    %905 = vmatprep.subr.mxu0 0.0
    %906 = vmatpush1.msra.mxu0 %v88
    %907 = vmatprep.subr.mxu0 0.0
    %908 = vmatpush1.msra.mxu0 %v89
    %909 = vmatprep.subr.mxu0 0.0
    %910 = vmatpush1.msra.mxu0 %v90
    %911 = vmatprep.subr.mxu0 0.0
    %912 = vmatpush1.msra.mxu0 %v91
    %913 = vmatprep.subr.mxu0 0.0
    %914 = vmatpush1.msra.mxu0 %v92
    %915 = vmatprep.subr.mxu0 0.0
    %916 = vmatpush1.msra.mxu0 %v93
    %917 = vmatprep.subr.mxu0 0.0
    %918 = vmatpush1.msra.mxu0 %v94
    %919 = vmatprep.subr.mxu0 0.0
    %920 = vmatpush1.msra.mxu0 0.0
    %921 = vmatprep.subr.mxu0 0.0
    %922 = vmatpush1.msra.mxu0 0.0
    %923 = vmatprep.subr.mxu0 0.0
    %924 = vmatpush1.msra.mxu0 0.0
    %925 = vmatprep.subr.mxu0 0.0
    %926 = vmatpush1.msra.mxu0 0.0
    %927 = vmatprep.subr.mxu0 0.0
    %928 = vmatpush1.msra.mxu0 0.0
    %929 = vmatprep.subr.mxu0 0.0
    %930 = vmatpush1.msra.mxu0 0.0
    %931 = vmatprep.subr.mxu0 0.0
    %932 = vmatpush1.msra.mxu0 0.0
    %933 = vmatprep.subr.mxu0 0.0
    %934 = vmatpush1.msra.mxu0 0.0
    %935 = vmatprep.subr.mxu0 0.0
    %936 = vmatpush1.msra.mxu0 0.0
    %937 = vmatprep.subr.mxu0 0.0
    %938 = vmatpush1.msra.mxu0 0.0
    %939 = vmatprep.subr.mxu0 0.0
    %940 = vmatpush1.msra.mxu0 0.0
    %941 = vmatprep.subr.mxu0 0.0
    %942 = vmatpush1.msra.mxu0 0.0
    %943 = vmatprep.subr.mxu0 0.0
    %944 = vmatpush1.msra.mxu0 0.0
    %945 = vmatprep.subr.mxu0 0.0
    %946 = vmatpush1.msra.mxu0 0.0
    %947 = vmatprep.subr.mxu0 0.0
    %948 = vmatpush1.msra.mxu0 0.0
    %949 = vmatprep.subr.mxu0 0.0
    %950 = vmatpush1.msra.mxu0 0.0
    %951 = vmatprep.subr.mxu0 0.0
    %952 = vmatpush1.msra.mxu0 0.0
    %953 = vmatprep.subr.mxu0 0.0
    %954 = vmatpush1.msra.mxu0 0.0
    %955 = vmatprep.subr.mxu0 0.0
    %956 = vmatpush1.msra.mxu0 0.0
    %957 = vmatprep.subr.mxu0 0.0
    %958 = vmatpush1.msra.mxu0 0.0
    %959 = vmatprep.subr.mxu0 0.0
    %960 = vmatpush1.msra.mxu0 0.0
    %961 = vmatprep.subr.mxu0 0.0
    %962 = vmatpush1.msra.mxu0 0.0
    %963 = vmatprep.subr.mxu0 0.0
    %964 = vmatpush1.msra.mxu0 0.0
    %965 = vmatprep.subr.mxu0 0.0
    %966 = vmatpush1.msra.mxu0 0.0
    %967 = vmatprep.mubr.f32.mxu0 0.0
    %968 = vmatmul.mubr.f32.gmra.mrb[0].mxu0 %v756
    %v969 = vpop.f32.mrb[0].mxu0
    %v970 = vadd.f32 0.0, %v969
    %v971 = vpop.f32.mrb[0].mxu0
    %972 = vdwg.mxu0
    %v973 = vld [vmem:[%s318] sm:$0xff]
    %v974 = vadd.f32 %v973, %v970
    %v975 = vtanh.pop %v974
    %v977 = vsel %vm295, %v975, 0
    %979 = vmatprep.subr.mxu0 0.0
    %980 = vmatpush1.msra.mxu0 %v95
    %981 = vmatprep.subr.mxu0 0.0
    %982 = vmatpush1.msra.mxu0 %v96
    %983 = vmatprep.subr.mxu0 0.0
    %984 = vmatpush1.msra.mxu0 %v97
    %985 = vmatprep.subr.mxu0 0.0
    %986 = vmatpush1.msra.mxu0 %v98
    %987 = vmatprep.subr.mxu0 0.0
    %988 = vmatpush1.msra.mxu0 %v99
    %989 = vmatprep.subr.mxu0 0.0
    %990 = vmatpush1.msra.mxu0 %v100
    %991 = vmatprep.subr.mxu0 0.0
    %992 = vmatpush1.msra.mxu0 %v101
    %993 = vmatprep.subr.mxu0 0.0
    %994 = vmatpush1.msra.mxu0 %v102
    %995 = vmatprep.subr.mxu0 0.0
    %996 = vmatpush1.msra.mxu0 0.0
    %997 = vmatprep.subr.mxu0 0.0
    %998 = vmatpush1.msra.mxu0 0.0
    %999 = vmatprep.subr.mxu0 0.0
    %1000 = vmatpush1.msra.mxu0 0.0
    %1001 = vmatprep.subr.mxu0 0.0
    %1002 = vmatpush1.msra.mxu0 0.0
    %1003 = vmatprep.subr.mxu0 0.0
    %1004 = vmatpush1.msra.mxu0 0.0
    %1005 = vmatprep.subr.mxu0 0.0
    %1006 = vmatpush1.msra.mxu0 0.0
    %1007 = vmatprep.subr.mxu0 0.0
    %1008 = vmatpush1.msra.mxu0 0.0
    %1009 = vmatprep.subr.mxu0 0.0
    %1010 = vmatpush1.msra.mxu0 0.0
    %1011 = vmatprep.subr.mxu0 0.0
    %1012 = vmatpush1.msra.mxu0 0.0
    %1013 = vmatprep.subr.mxu0 0.0
    %1014 = vmatpush1.msra.mxu0 0.0
    %1015 = vmatprep.subr.mxu0 0.0
    %1016 = vmatpush1.msra.mxu0 0.0
    %1017 = vmatprep.subr.mxu0 0.0
    %1018 = vmatpush1.msra.mxu0 0.0
    %1019 = vmatprep.subr.mxu0 0.0
    %1020 = vmatpush1.msra.mxu0 0.0
    %1021 = vmatprep.subr.mxu0 0.0
    %1022 = vmatpush1.msra.mxu0 0.0
    %1023 = vmatprep.subr.mxu0 0.0
    %1024 = vmatpush1.msra.mxu0 0.0
    %1025 = vmatprep.subr.mxu0 0.0
    %1026 = vmatpush1.msra.mxu0 0.0
    %1027 = vmatprep.subr.mxu0 0.0
    %1028 = vmatpush1.msra.mxu0 0.0
    %1029 = vmatprep.subr.mxu0 0.0
    %1030 = vmatpush1.msra.mxu0 0.0
    %1031 = vmatprep.subr.mxu0 0.0
    %1032 = vmatpush1.msra.mxu0 0.0
    %1033 = vmatprep.subr.mxu0 0.0
    %1034 = vmatpush1.msra.mxu0 0.0
    %1035 = vmatprep.subr.mxu0 0.0
    %1036 = vmatpush1.msra.mxu0 0.0
    %1037 = vmatprep.subr.mxu0 0.0
    %1038 = vmatpush1.msra.mxu0 0.0
    %1039 = vmatprep.subr.mxu0 0.0
    %1040 = vmatpush1.msra.mxu0 0.0
    %1041 = vmatprep.subr.mxu0 0.0
    %1042 = vmatpush1.msra.mxu0 0.0
    %1043 = vmatprep.mubr.f32.mxu0 0.0
    %1044 = vmatmul.mubr.f32.gmra.mrb[0].mxu0 %v977
    %v1045 = vpop.f32.mrb[0].mxu0
    %v1046 = vadd.f32 %v900, %v1045
    %v1047 = vpop.f32.mrb[0].mxu0
    %1048 = vdwg.mxu0
    %v1049 = vadd.f32 %v1046, %v116
    %v1050 = vtanh.pop %v1049
    %v1052 = vsel %vm295, %v1050, 0
    %1054 = vmatprep.subr.mxu0 0.0
    %1055 = vmatpush1.msra.mxu0 %v103
    %1056 = vmatprep.subr.mxu0 0.0
    %1057 = vmatpush1.msra.mxu0 %v104
    %1058 = vmatprep.subr.mxu0 0.0
    %1059 = vmatpush1.msra.mxu0 %v105
    %1060 = vmatprep.subr.mxu0 0.0
    %1061 = vmatpush1.msra.mxu0 %v106
    %1062 = vmatprep.subr.mxu0 0.0
    %1063 = vmatpush1.msra.mxu0 %v107
    %1064 = vmatprep.subr.mxu0 0.0
    %1065 = vmatpush1.msra.mxu0 %v108
    %1066 = vmatprep.subr.mxu0 0.0
    %1067 = vmatpush1.msra.mxu0 %v109
    %1068 = vmatprep.subr.mxu0 0.0
    %1069 = vmatpush1.msra.mxu0 %v110
    %1070 = vmatprep.subr.mxu0 0.0
    %1071 = vmatpush1.msra.mxu0 0.0
    %1072 = vmatprep.subr.mxu0 0.0
    %1073 = vmatpush1.msra.mxu0 0.0
    %1074 = vmatprep.subr.mxu0 0.0
    %1075 = vmatpush1.msra.mxu0 0.0
    %1076 = vmatprep.subr.mxu0 0.0
    %1077 = vmatpush1.msra.mxu0 0.0
    %1078 = vmatprep.subr.mxu0 0.0
    %1079 = vmatpush1.msra.mxu0 0.0
    %1080 = vmatprep.subr.mxu0 0.0
    %1081 = vmatpush1.msra.mxu0 0.0
    %1082 = vmatprep.subr.mxu0 0.0
    %1083 = vmatpush1.msra.mxu0 0.0
    %1084 = vmatprep.subr.mxu0 0.0
    %1085 = vmatpush1.msra.mxu0 0.0
    %1086 = vmatprep.subr.mxu0 0.0
    %1087 = vmatpush1.msra.mxu0 0.0
    %1088 = vmatprep.subr.mxu0 0.0
    %1089 = vmatpush1.msra.mxu0 0.0
    %1090 = vmatprep.subr.mxu0 0.0
    %1091 = vmatpush1.msra.mxu0 0.0
    %1092 = vmatprep.subr.mxu0 0.0
    %1093 = vmatpush1.msra.mxu0 0.0
    %1094 = vmatprep.subr.mxu0 0.0
    %1095 = vmatpush1.msra.mxu0 0.0
    %1096 = vmatprep.subr.mxu0 0.0
    %1097 = vmatpush1.msra.mxu0 0.0
    %1098 = vmatprep.subr.mxu0 0.0
    %1099 = vmatpush1.msra.mxu0 0.0
    %1100 = vmatprep.subr.mxu0 0.0
    %1101 = vmatpush1.msra.mxu0 0.0
    %1102 = vmatprep.subr.mxu0 0.0
    %1103 = vmatpush1.msra.mxu0 0.0
    %1104 = vmatprep.subr.mxu0 0.0
    %1105 = vmatpush1.msra.mxu0 0.0
    %1106 = vmatprep.subr.mxu0 0.0
    %1107 = vmatpush1.msra.mxu0 0.0
    %1108 = vmatprep.subr.mxu0 0.0
    %1109 = vmatpush1.msra.mxu0 0.0
    %1110 = vmatprep.subr.mxu0 0.0
    %1111 = vmatpush1.msra.mxu0 0.0
    %1112 = vmatprep.subr.mxu0 0.0
    %1113 = vmatpush1.msra.mxu0 0.0
    %1114 = vmatprep.subr.mxu0 0.0
    %1115 = vmatpush1.msra.mxu0 0.0
    %1116 = vmatprep.subr.mxu0 0.0
    %1117 = vmatpush1.msra.mxu0 0.0
    %1118 = vmatprep.mubr.f32.mxu0 0.0
    %1119 = vmatmul.mubr.f32.gmra.mrb[0].mxu0 %v1052
    %v1120 = vpop.f32.mrb[0].mxu0
    %v1121 = vadd.f32 0.0, %v1120
    %v1122 = vpop.f32.mrb[0].mxu0
    %1123 = vdwg.mxu0
    %1124 = vmatprep.subr.mxu0 0.0
    %1125 = vmatpush1.msra.mxu0 %v87
    %1126 = vmatprep.subr.mxu0 0.0
    %1127 = vmatpush1.msra.mxu0 %v88
    %1128 = vmatprep.subr.mxu0 0.0
    %1129 = vmatpush1.msra.mxu0 %v89
    %1130 = vmatprep.subr.mxu0 0.0
    %1131 = vmatpush1.msra.mxu0 %v90
    %1132 = vmatprep.subr.mxu0 0.0
    %1133 = vmatpush1.msra.mxu0 %v91
    %1134 = vmatprep.subr.mxu0 0.0
    %1135 = vmatpush1.msra.mxu0 %v92
    %1136 = vmatprep.subr.mxu0 0.0
    %1137 = vmatpush1.msra.mxu0 %v93
    %1138 = vmatprep.subr.mxu0 0.0
    %1139 = vmatpush1.msra.mxu0 %v94
    %1140 = vmatprep.subr.mxu0 0.0
    %1141 = vmatpush1.msra.mxu0 0.0
    %1142 = vmatprep.subr.mxu0 0.0
    %1143 = vmatpush1.msra.mxu0 0.0
    %1144 = vmatprep.subr.mxu0 0.0
    %1145 = vmatpush1.msra.mxu0 0.0
    %1146 = vmatprep.subr.mxu0 0.0
    %1147 = vmatpush1.msra.mxu0 0.0
    %1148 = vmatprep.subr.mxu0 0.0
    %1149 = vmatpush1.msra.mxu0 0.0
    %1150 = vmatprep.subr.mxu0 0.0
    %1151 = vmatpush1.msra.mxu0 0.0
    %1152 = vmatprep.subr.mxu0 0.0
    %1153 = vmatpush1.msra.mxu0 0.0
    %1154 = vmatprep.subr.mxu0 0.0
    %1155 = vmatpush1.msra.mxu0 0.0
    %1156 = vmatprep.subr.mxu0 0.0
    %1157 = vmatpush1.msra.mxu0 0.0
    %1158 = vmatprep.subr.mxu0 0.0
    %1159 = vmatpush1.msra.mxu0 0.0
    %1160 = vmatprep.subr.mxu0 0.0
    %1161 = vmatpush1.msra.mxu0 0.0
    %1162 = vmatprep.subr.mxu0 0.0
    %1163 = vmatpush1.msra.mxu0 0.0
    %1164 = vmatprep.subr.mxu0 0.0
    %1165 = vmatpush1.msra.mxu0 0.0
    %1166 = vmatprep.subr.mxu0 0.0
    %1167 = vmatpush1.msra.mxu0 0.0
    %1168 = vmatprep.subr.mxu0 0.0
    %1169 = vmatpush1.msra.mxu0 0.0
    %1170 = vmatprep.subr.mxu0 0.0
    %1171 = vmatpush1.msra.mxu0 0.0
    %1172 = vmatprep.subr.mxu0 0.0
    %1173 = vmatpush1.msra.mxu0 0.0
    %1174 = vmatprep.subr.mxu0 0.0
    %1175 = vmatpush1.msra.mxu0 0.0
    %1176 = vmatprep.subr.mxu0 0.0
    %1177 = vmatpush1.msra.mxu0 0.0
    %1178 = vmatprep.subr.mxu0 0.0
    %1179 = vmatpush1.msra.mxu0 0.0
    %1180 = vmatprep.subr.mxu0 0.0
    %1181 = vmatpush1.msra.mxu0 0.0
    %1182 = vmatprep.subr.mxu0 0.0
    %1183 = vmatpush1.msra.mxu0 0.0
    %1184 = vmatprep.subr.mxu0 0.0
    %1185 = vmatpush1.msra.mxu0 0.0
    %1186 = vmatprep.subr.mxu0 0.0
    %1187 = vmatpush1.msra.mxu0 0.0
    %1188 = vmatprep.mubr.f32.mxu0 0.0
    %1189 = vmatmul.mubr.f32.gmra.mrb[0].mxu0 %v977
    %v1190 = vpop.f32.mrb[0].mxu0
    %v1191 = vadd.f32 0.0, %v1190
    %v1192 = vpop.f32.mrb[0].mxu0
    %1193 = vdwg.mxu0
    %v1194 = vld [vmem:[%s331] sm:$0xff]
    %v1195 = vadd.f32 %v1194, %v1191
    %v1196 = vtanh.pop %v1195
    %v1198 = vsel %vm295, %v1196, 0
    %1200 = vmatprep.subr.mxu0 0.0
    %1201 = vmatpush1.msra.mxu0 %v95
    %1202 = vmatprep.subr.mxu0 0.0
    %1203 = vmatpush1.msra.mxu0 %v96
    %1204 = vmatprep.subr.mxu0 0.0
    %1205 = vmatpush1.msra.mxu0 %v97
    %1206 = vmatprep.subr.mxu0 0.0
    %1207 = vmatpush1.msra.mxu0 %v98
    %1208 = vmatprep.subr.mxu0 0.0
    %1209 = vmatpush1.msra.mxu0 %v99
    %1210 = vmatprep.subr.mxu0 0.0
    %1211 = vmatpush1.msra.mxu0 %v100
    %1212 = vmatprep.subr.mxu0 0.0
    %1213 = vmatpush1.msra.mxu0 %v101
    %1214 = vmatprep.subr.mxu0 0.0
    %1215 = vmatpush1.msra.mxu0 %v102
    %1216 = vmatprep.subr.mxu0 0.0
    %1217 = vmatpush1.msra.mxu0 0.0
    %1218 = vmatprep.subr.mxu0 0.0
    %1219 = vmatpush1.msra.mxu0 0.0
    %1220 = vmatprep.subr.mxu0 0.0
    %1221 = vmatpush1.msra.mxu0 0.0
    %1222 = vmatprep.subr.mxu0 0.0
    %1223 = vmatpush1.msra.mxu0 0.0
    %1224 = vmatprep.subr.mxu0 0.0
    %1225 = vmatpush1.msra.mxu0 0.0
    %1226 = vmatprep.subr.mxu0 0.0
    %1227 = vmatpush1.msra.mxu0 0.0
    %1228 = vmatprep.subr.mxu0 0.0
    %1229 = vmatpush1.msra.mxu0 0.0
    %1230 = vmatprep.subr.mxu0 0.0
    %1231 = vmatpush1.msra.mxu0 0.0
    %1232 = vmatprep.subr.mxu0 0.0
    %1233 = vmatpush1.msra.mxu0 0.0
    %1234 = vmatprep.subr.mxu0 0.0
    %1235 = vmatpush1.msra.mxu0 0.0
    %1236 = vmatprep.subr.mxu0 0.0
    %1237 = vmatpush1.msra.mxu0 0.0
    %1238 = vmatprep.subr.mxu0 0.0
    %1239 = vmatpush1.msra.mxu0 0.0
    %1240 = vmatprep.subr.mxu0 0.0
    %1241 = vmatpush1.msra.mxu0 0.0
    %1242 = vmatprep.subr.mxu0 0.0
    %1243 = vmatpush1.msra.mxu0 0.0
    %1244 = vmatprep.subr.mxu0 0.0
    %1245 = vmatpush1.msra.mxu0 0.0
    %1246 = vmatprep.subr.mxu0 0.0
    %1247 = vmatpush1.msra.mxu0 0.0
    %1248 = vmatprep.subr.mxu0 0.0
    %1249 = vmatpush1.msra.mxu0 0.0
    %1250 = vmatprep.subr.mxu0 0.0
    %1251 = vmatpush1.msra.mxu0 0.0
    %1252 = vmatprep.subr.mxu0 0.0
    %1253 = vmatpush1.msra.mxu0 0.0
    %1254 = vmatprep.subr.mxu0 0.0
    %1255 = vmatpush1.msra.mxu0 0.0
    %1256 = vmatprep.subr.mxu0 0.0
    %1257 = vmatpush1.msra.mxu0 0.0
    %1258 = vmatprep.subr.mxu0 0.0
    %1259 = vmatpush1.msra.mxu0 0.0
    %1260 = vmatprep.subr.mxu0 0.0
    %1261 = vmatpush1.msra.mxu0 0.0
    %1262 = vmatprep.subr.mxu0 0.0
    %1263 = vmatpush1.msra.mxu0 0.0
    %1264 = vmatprep.mubr.f32.mxu0 0.0
    %1265 = vmatmul.mubr.f32.gmra.mrb[0].mxu0 %v1198
    %v1266 = vpop.f32.mrb[0].mxu0
    %v1267 = vadd.f32 %v1121, %v1266
    %v1268 = vpop.f32.mrb[0].mxu0
    %1269 = vdwg.mxu0
    %v1270 = vadd.f32 %v1267, %v116
    %v1271 = vtanh.pop %v1270
    %v1273 = vsel %vm295, %v1271, 0
    %1275 = vmatprep.subr.mxu0 0.0
    %1276 = vmatpush1.msra.mxu0 %v103
    %1277 = vmatprep.subr.mxu0 0.0
    %1278 = vmatpush1.msra.mxu0 %v104
    %1279 = vmatprep.subr.mxu0 0.0
    %1280 = vmatpush1.msra.mxu0 %v105
    %1281 = vmatprep.subr.mxu0 0.0
    %1282 = vmatpush1.msra.mxu0 %v106
    %1283 = vmatprep.subr.mxu0 0.0
    %1284 = vmatpush1.msra.mxu0 %v107
    %1285 = vmatprep.subr.mxu0 0.0
    %1286 = vmatpush1.msra.mxu0 %v108
    %1287 = vmatprep.subr.mxu0 0.0
    %1288 = vmatpush1.msra.mxu0 %v109
    %1289 = vmatprep.subr.mxu0 0.0
    %1290 = vmatpush1.msra.mxu0 %v110
    %1291 = vmatprep.subr.mxu0 0.0
    %1292 = vmatpush1.msra.mxu0 0.0
    %1293 = vmatprep.subr.mxu0 0.0
    %1294 = vmatpush1.msra.mxu0 0.0
    %1295 = vmatprep.subr.mxu0 0.0
    %1296 = vmatpush1.msra.mxu0 0.0
    %1297 = vmatprep.subr.mxu0 0.0
    %1298 = vmatpush1.msra.mxu0 0.0
    %1299 = vmatprep.subr.mxu0 0.0
    %1300 = vmatpush1.msra.mxu0 0.0
    %1301 = vmatprep.subr.mxu0 0.0
    %1302 = vmatpush1.msra.mxu0 0.0
    %1303 = vmatprep.subr.mxu0 0.0
    %1304 = vmatpush1.msra.mxu0 0.0
    %1305 = vmatprep.subr.mxu0 0.0
    %1306 = vmatpush1.msra.mxu0 0.0
    %1307 = vmatprep.subr.mxu0 0.0
    %1308 = vmatpush1.msra.mxu0 0.0
    %1309 = vmatprep.subr.mxu0 0.0
    %1310 = vmatpush1.msra.mxu0 0.0
    %1311 = vmatprep.subr.mxu0 0.0
    %1312 = vmatpush1.msra.mxu0 0.0
    %1313 = vmatprep.subr.mxu0 0.0
    %1314 = vmatpush1.msra.mxu0 0.0
    %1315 = vmatprep.subr.mxu0 0.0
    %1316 = vmatpush1.msra.mxu0 0.0
    %1317 = vmatprep.subr.mxu0 0.0
    %1318 = vmatpush1.msra.mxu0 0.0
    %1319 = vmatprep.subr.mxu0 0.0
    %1320 = vmatpush1.msra.mxu0 0.0
    %1321 = vmatprep.subr.mxu0 0.0
    %1322 = vmatpush1.msra.mxu0 0.0
    %1323 = vmatprep.subr.mxu0 0.0
    %1324 = vmatpush1.msra.mxu0 0.0
    %1325 = vmatprep.subr.mxu0 0.0
    %1326 = vmatpush1.msra.mxu0 0.0
    %1327 = vmatprep.subr.mxu0 0.0
    %1328 = vmatpush1.msra.mxu0 0.0
    %1329 = vmatprep.subr.mxu0 0.0
    %1330 = vmatpush1.msra.mxu0 0.0
    %1331 = vmatprep.subr.mxu0 0.0
    %1332 = vmatpush1.msra.mxu0 0.0
    %1333 = vmatprep.subr.mxu0 0.0
    %1334 = vmatpush1.msra.mxu0 0.0
    %1335 = vmatprep.subr.mxu0 0.0
    %1336 = vmatpush1.msra.mxu0 0.0
    %1337 = vmatprep.subr.mxu0 0.0
    %1338 = vmatpush1.msra.mxu0 0.0
    %1339 = vmatprep.mubr.f32.mxu0 0.0
    %1340 = vmatmul.mubr.f32.gmra.mrb[0].mxu0 %v1273
    %v1341 = vpop.f32.mrb[0].mxu0
    %v1342 = vadd.f32 0.0, %v1341
    %v1343 = vpop.f32.mrb[0].mxu0
    %1344 = vdwg.mxu0
    %1345 = vmatprep.subr.mxu0 0.0
    %1346 = vmatpush1.msra.mxu0 %v87
    %1347 = vmatprep.subr.mxu0 0.0
    %1348 = vmatpush1.msra.mxu0 %v88
    %1349 = vmatprep.subr.mxu0 0.0
    %1350 = vmatpush1.msra.mxu0 %v89
    %1351 = vmatprep.subr.mxu0 0.0
    %1352 = vmatpush1.msra.mxu0 %v90
    %1353 = vmatprep.subr.mxu0 0.0
    %1354 = vmatpush1.msra.mxu0 %v91
    %1355 = vmatprep.subr.mxu0 0.0
    %1356 = vmatpush1.msra.mxu0 %v92
    %1357 = vmatprep.subr.mxu0 0.0
    %1358 = vmatpush1.msra.mxu0 %v93
    %1359 = vmatprep.subr.mxu0 0.0
    %1360 = vmatpush1.msra.mxu0 %v94
    %1361 = vmatprep.subr.mxu0 0.0
    %1362 = vmatpush1.msra.mxu0 0.0
    %1363 = vmatprep.subr.mxu0 0.0
    %1364 = vmatpush1.msra.mxu0 0.0
    %1365 = vmatprep.subr.mxu0 0.0
    %1366 = vmatpush1.msra.mxu0 0.0
    %1367 = vmatprep.subr.mxu0 0.0
    %1368 = vmatpush1.msra.mxu0 0.0
    %1369 = vmatprep.subr.mxu0 0.0
    %1370 = vmatpush1.msra.mxu0 0.0
    %1371 = vmatprep.subr.mxu0 0.0
    %1372 = vmatpush1.msra.mxu0 0.0
    %1373 = vmatprep.subr.mxu0 0.0
    %1374 = vmatpush1.msra.mxu0 0.0
    %1375 = vmatprep.subr.mxu0 0.0
    %1376 = vmatpush1.msra.mxu0 0.0
    %1377 = vmatprep.subr.mxu0 0.0
    %1378 = vmatpush1.msra.mxu0 0.0
    %1379 = vmatprep.subr.mxu0 0.0
    %1380 = vmatpush1.msra.mxu0 0.0
    %1381 = vmatprep.subr.mxu0 0.0
    %1382 = vmatpush1.msra.mxu0 0.0
    %1383 = vmatprep.subr.mxu0 0.0
    %1384 = vmatpush1.msra.mxu0 0.0
    %1385 = vmatprep.subr.mxu0 0.0
    %1386 = vmatpush1.msra.mxu0 0.0
    %1387 = vmatprep.subr.mxu0 0.0
    %1388 = vmatpush1.msra.mxu0 0.0
    %1389 = vmatprep.subr.mxu0 0.0
    %1390 = vmatpush1.msra.mxu0 0.0
    %1391 = vmatprep.subr.mxu0 0.0
    %1392 = vmatpush1.msra.mxu0 0.0
    %1393 = vmatprep.subr.mxu0 0.0
    %1394 = vmatpush1.msra.mxu0 0.0
    %1395 = vmatprep.subr.mxu0 0.0
    %1396 = vmatpush1.msra.mxu0 0.0
    %1397 = vmatprep.subr.mxu0 0.0
    %1398 = vmatpush1.msra.mxu0 0.0
    %1399 = vmatprep.subr.mxu0 0.0
    %1400 = vmatpush1.msra.mxu0 0.0
    %1401 = vmatprep.subr.mxu0 0.0
    %1402 = vmatpush1.msra.mxu0 0.0
    %1403 = vmatprep.subr.mxu0 0.0
    %1404 = vmatpush1.msra.mxu0 0.0
    %1405 = vmatprep.subr.mxu0 0.0
    %1406 = vmatpush1.msra.mxu0 0.0
    %1407 = vmatprep.subr.mxu0 0.0
    %1408 = vmatpush1.msra.mxu0 0.0
    %1409 = vmatprep.mubr.f32.mxu0 0.0
    %1410 = vmatmul.mubr.f32.gmra.mrb[0].mxu0 %v1198
    %v1411 = vpop.f32.mrb[0].mxu0
    %v1412 = vadd.f32 0.0, %v1411
    %v1413 = vpop.f32.mrb[0].mxu0
    %1414 = vdwg.mxu0
    %v1415 = vld [vmem:[%s344] sm:$0xff]
    %v1416 = vadd.f32 %v1415, %v1412
    %v1417 = vtanh.pop %v1416
    %v1419 = vsel %vm295, %v1417, 0
    %1421 = vmatprep.subr.mxu0 0.0
    %1422 = vmatpush1.msra.mxu0 %v95
    %1423 = vmatprep.subr.mxu0 0.0
    %1424 = vmatpush1.msra.mxu0 %v96
    %1425 = vmatprep.subr.mxu0 0.0
    %1426 = vmatpush1.msra.mxu0 %v97
    %1427 = vmatprep.subr.mxu0 0.0
    %1428 = vmatpush1.msra.mxu0 %v98
    %1429 = vmatprep.subr.mxu0 0.0
    %1430 = vmatpush1.msra.mxu0 %v99
    %1431 = vmatprep.subr.mxu0 0.0
    %1432 = vmatpush1.msra.mxu0 %v100
    %1433 = vmatprep.subr.mxu0 0.0
    %1434 = vmatpush1.msra.mxu0 %v101
    %1435 = vmatprep.subr.mxu0 0.0
    %1436 = vmatpush1.msra.mxu0 %v102
    %1437 = vmatprep.subr.mxu0 0.0
    %1438 = vmatpush1.msra.mxu0 0.0
    %1439 = vmatprep.subr.mxu0 0.0
    %1440 = vmatpush1.msra.mxu0 0.0
    %1441 = vmatprep.subr.mxu0 0.0
    %1442 = vmatpush1.msra.mxu0 0.0
    %1443 = vmatprep.subr.mxu0 0.0
    %1444 = vmatpush1.msra.mxu0 0.0
    %1445 = vmatprep.subr.mxu0 0.0
    %1446 = vmatpush1.msra.mxu0 0.0
    %1447 = vmatprep.subr.mxu0 0.0
    %1448 = vmatpush1.msra.mxu0 0.0
    %1449 = vmatprep.subr.mxu0 0.0
    %1450 = vmatpush1.msra.mxu0 0.0
    %1451 = vmatprep.subr.mxu0 0.0
    %1452 = vmatpush1.msra.mxu0 0.0
    %1453 = vmatprep.subr.mxu0 0.0
    %1454 = vmatpush1.msra.mxu0 0.0
    %1455 = vmatprep.subr.mxu0 0.0
    %1456 = vmatpush1.msra.mxu0 0.0
    %1457 = vmatprep.subr.mxu0 0.0
    %1458 = vmatpush1.msra.mxu0 0.0
    %1459 = vmatprep.subr.mxu0 0.0
    %1460 = vmatpush1.msra.mxu0 0.0
    %1461 = vmatprep.subr.mxu0 0.0
    %1462 = vmatpush1.msra.mxu0 0.0
    %1463 = vmatprep.subr.mxu0 0.0
    %1464 = vmatpush1.msra.mxu0 0.0
    %1465 = vmatprep.subr.mxu0 0.0
    %1466 = vmatpush1.msra.mxu0 0.0
    %1467 = vmatprep.subr.mxu0 0.0
    %1468 = vmatpush1.msra.mxu0 0.0
    %1469 = vmatprep.subr.mxu0 0.0
    %1470 = vmatpush1.msra.mxu0 0.0
    %1471 = vmatprep.subr.mxu0 0.0
    %1472 = vmatpush1.msra.mxu0 0.0
    %1473 = vmatprep.subr.mxu0 0.0
    %1474 = vmatpush1.msra.mxu0 0.0
    %1475 = vmatprep.subr.mxu0 0.0
    %1476 = vmatpush1.msra.mxu0 0.0
    %1477 = vmatprep.subr.mxu0 0.0
    %1478 = vmatpush1.msra.mxu0 0.0
    %1479 = vmatprep.subr.mxu0 0.0
    %1480 = vmatpush1.msra.mxu0 0.0
    %1481 = vmatprep.subr.mxu0 0.0
    %1482 = vmatpush1.msra.mxu0 0.0
    %1483 = vmatprep.subr.mxu0 0.0
    %1484 = vmatpush1.msra.mxu0 0.0
    %1485 = vmatprep.mubr.f32.mxu0 0.0
    %1486 = vmatmul.mubr.f32.gmra.mrb[0].mxu0 %v1419
    %v1487 = vpop.f32.mrb[0].mxu0
    %v1488 = vadd.f32 %v1342, %v1487
    %v1489 = vpop.f32.mrb[0].mxu0
    %1490 = vdwg.mxu0
    %v1491 = vadd.f32 %v1488, %v116
    %v1492 = vtanh.pop %v1491
    %v1494 = vsel %vm295, %v1492, 0
    %1496 = vmatprep.subr.mxu0 0.0
    %1497 = vmatpush1.msra.mxu0 %v103
    %1498 = vmatprep.subr.mxu0 0.0
    %1499 = vmatpush1.msra.mxu0 %v104
    %1500 = vmatprep.subr.mxu0 0.0
    %1501 = vmatpush1.msra.mxu0 %v105
    %1502 = vmatprep.subr.mxu0 0.0
    %1503 = vmatpush1.msra.mxu0 %v106
    %1504 = vmatprep.subr.mxu0 0.0
    %1505 = vmatpush1.msra.mxu0 %v107
    %1506 = vmatprep.subr.mxu0 0.0
    %1507 = vmatpush1.msra.mxu0 %v108
    %1508 = vmatprep.subr.mxu0 0.0
    %1509 = vmatpush1.msra.mxu0 %v109
    %1510 = vmatprep.subr.mxu0 0.0
    %1511 = vmatpush1.msra.mxu0 %v110
    %1512 = vmatprep.subr.mxu0 0.0
    %1513 = vmatpush1.msra.mxu0 0.0
    %1514 = vmatprep.subr.mxu0 0.0
    %1515 = vmatpush1.msra.mxu0 0.0
    %1516 = vmatprep.subr.mxu0 0.0
    %1517 = vmatpush1.msra.mxu0 0.0
    %1518 = vmatprep.subr.mxu0 0.0
    %1519 = vmatpush1.msra.mxu0 0.0
    %1520 = vmatprep.subr.mxu0 0.0
    %1521 = vmatpush1.msra.mxu0 0.0
    %1522 = vmatprep.subr.mxu0 0.0
    %1523 = vmatpush1.msra.mxu0 0.0
    %1524 = vmatprep.subr.mxu0 0.0
    %1525 = vmatpush1.msra.mxu0 0.0
    %1526 = vmatprep.subr.mxu0 0.0
    %1527 = vmatpush1.msra.mxu0 0.0
    %1528 = vmatprep.subr.mxu0 0.0
    %1529 = vmatpush1.msra.mxu0 0.0
    %1530 = vmatprep.subr.mxu0 0.0
    %1531 = vmatpush1.msra.mxu0 0.0
    %1532 = vmatprep.subr.mxu0 0.0
    %1533 = vmatpush1.msra.mxu0 0.0
    %1534 = vmatprep.subr.mxu0 0.0
    %1535 = vmatpush1.msra.mxu0 0.0
    %1536 = vmatprep.subr.mxu0 0.0
    %1537 = vmatpush1.msra.mxu0 0.0
    %1538 = vmatprep.subr.mxu0 0.0
    %1539 = vmatpush1.msra.mxu0 0.0
    %1540 = vmatprep.subr.mxu0 0.0
    %1541 = vmatpush1.msra.mxu0 0.0
    %1542 = vmatprep.subr.mxu0 0.0
    %1543 = vmatpush1.msra.mxu0 0.0
    %1544 = vmatprep.subr.mxu0 0.0
    %1545 = vmatpush1.msra.mxu0 0.0
    %1546 = vmatprep.subr.mxu0 0.0
    %1547 = vmatpush1.msra.mxu0 0.0
    %1548 = vmatprep.subr.mxu0 0.0
    %1549 = vmatpush1.msra.mxu0 0.0
    %1550 = vmatprep.subr.mxu0 0.0
    %1551 = vmatpush1.msra.mxu0 0.0
    %1552 = vmatprep.subr.mxu0 0.0
    %1553 = vmatpush1.msra.mxu0 0.0
    %1554 = vmatprep.subr.mxu0 0.0
    %1555 = vmatpush1.msra.mxu0 0.0
    %1556 = vmatprep.subr.mxu0 0.0
    %1557 = vmatpush1.msra.mxu0 0.0
    %1558 = vmatprep.subr.mxu0 0.0
    %1559 = vmatpush1.msra.mxu0 0.0
    %1560 = vmatprep.mubr.f32.mxu0 0.0
    %1561 = vmatmul.mubr.f32.gmra.mrb[0].mxu0 %v1494
    %v1562 = vpop.f32.mrb[0].mxu0
    %v1563 = vadd.f32 0.0, %v1562
    %v1564 = vpop.f32.mrb[0].mxu0
    %1565 = vdwg.mxu0
    %1566 = vmatprep.subr.mxu0 0.0
    %1567 = vmatpush1.msra.mxu0 %v87
    %1568 = vmatprep.subr.mxu0 0.0
    %1569 = vmatpush1.msra.mxu0 %v88
    %1570 = vmatprep.subr.mxu0 0.0
    %1571 = vmatpush1.msra.mxu0 %v89
    %1572 = vmatprep.subr.mxu0 0.0
    %1573 = vmatpush1.msra.mxu0 %v90
    %1574 = vmatprep.subr.mxu0 0.0
    %1575 = vmatpush1.msra.mxu0 %v91
    %1576 = vmatprep.subr.mxu0 0.0
    %1577 = vmatpush1.msra.mxu0 %v92
    %1578 = vmatprep.subr.mxu0 0.0
    %1579 = vmatpush1.msra.mxu0 %v93
    %1580 = vmatprep.subr.mxu0 0.0
    %1581 = vmatpush1.msra.mxu0 %v94
    %1582 = vmatprep.subr.mxu0 0.0
    %1583 = vmatpush1.msra.mxu0 0.0
    %1584 = vmatprep.subr.mxu0 0.0
    %1585 = vmatpush1.msra.mxu0 0.0
    %1586 = vmatprep.subr.mxu0 0.0
    %1587 = vmatpush1.msra.mxu0 0.0
    %1588 = vmatprep.subr.mxu0 0.0
    %1589 = vmatpush1.msra.mxu0 0.0
    %1590 = vmatprep.subr.mxu0 0.0
    %1591 = vmatpush1.msra.mxu0 0.0
    %1592 = vmatprep.subr.mxu0 0.0
    %1593 = vmatpush1.msra.mxu0 0.0
    %1594 = vmatprep.subr.mxu0 0.0
    %1595 = vmatpush1.msra.mxu0 0.0
    %1596 = vmatprep.subr.mxu0 0.0
    %1597 = vmatpush1.msra.mxu0 0.0
    %1598 = vmatprep.subr.mxu0 0.0
    %1599 = vmatpush1.msra.mxu0 0.0
    %1600 = vmatprep.subr.mxu0 0.0
    %1601 = vmatpush1.msra.mxu0 0.0
    %1602 = vmatprep.subr.mxu0 0.0
    %1603 = vmatpush1.msra.mxu0 0.0
    %1604 = vmatprep.subr.mxu0 0.0
    %1605 = vmatpush1.msra.mxu0 0.0
    %1606 = vmatprep.subr.mxu0 0.0
    %1607 = vmatpush1.msra.mxu0 0.0
    %1608 = vmatprep.subr.mxu0 0.0
    %1609 = vmatpush1.msra.mxu0 0.0
    %1610 = vmatprep.subr.mxu0 0.0
    %1611 = vmatpush1.msra.mxu0 0.0
    %1612 = vmatprep.subr.mxu0 0.0
    %1613 = vmatpush1.msra.mxu0 0.0
    %1614 = vmatprep.subr.mxu0 0.0
    %1615 = vmatpush1.msra.mxu0 0.0
    %1616 = vmatprep.subr.mxu0 0.0
    %1617 = vmatpush1.msra.mxu0 0.0
    %1618 = vmatprep.subr.mxu0 0.0
    %1619 = vmatpush1.msra.mxu0 0.0
    %1620 = vmatprep.subr.mxu0 0.0
    %1621 = vmatpush1.msra.mxu0 0.0
    %1622 = vmatprep.subr.mxu0 0.0
    %1623 = vmatpush1.msra.mxu0 0.0
    %1624 = vmatprep.subr.mxu0 0.0
    %1625 = vmatpush1.msra.mxu0 0.0
    %1626 = vmatprep.subr.mxu0 0.0
    %1627 = vmatpush1.msra.mxu0 0.0
    %1628 = vmatprep.subr.mxu0 0.0
    %1629 = vmatpush1.msra.mxu0 0.0
    %1630 = vmatprep.mubr.f32.mxu0 0.0
    %1631 = vmatmul.mubr.f32.gmra.mrb[0].mxu0 %v1419
    %v1632 = vpop.f32.mrb[0].mxu0
    %v1633 = vadd.f32 0.0, %v1632
    %v1634 = vpop.f32.mrb[0].mxu0
    %1635 = vdwg.mxu0
    %v1636 = vld [vmem:[%s357] sm:$0xff]
    %v1637 = vadd.f32 %v1636, %v1633
    %v1638 = vtanh.pop %v1637
    %v1640 = vsel %vm295, %v1638, 0
    %1642 = vmatprep.subr.mxu0 0.0
    %1643 = vmatpush1.msra.mxu0 %v95
    %1644 = vmatprep.subr.mxu0 0.0
    %1645 = vmatpush1.msra.mxu0 %v96
    %1646 = vmatprep.subr.mxu0 0.0
    %1647 = vmatpush1.msra.mxu0 %v97
    %1648 = vmatprep.subr.mxu0 0.0
    %1649 = vmatpush1.msra.mxu0 %v98
    %1650 = vmatprep.subr.mxu0 0.0
    %1651 = vmatpush1.msra.mxu0 %v99
    %1652 = vmatprep.subr.mxu0 0.0
    %1653 = vmatpush1.msra.mxu0 %v100
    %1654 = vmatprep.subr.mxu0 0.0
    %1655 = vmatpush1.msra.mxu0 %v101
    %1656 = vmatprep.subr.mxu0 0.0
    %1657 = vmatpush1.msra.mxu0 %v102
    %1658 = vmatprep.subr.mxu0 0.0
    %1659 = vmatpush1.msra.mxu0 0.0
    %1660 = vmatprep.subr.mxu0 0.0
    %1661 = vmatpush1.msra.mxu0 0.0
    %1662 = vmatprep.subr.mxu0 0.0
    %1663 = vmatpush1.msra.mxu0 0.0
    %1664 = vmatprep.subr.mxu0 0.0
    %1665 = vmatpush1.msra.mxu0 0.0
    %1666 = vmatprep.subr.mxu0 0.0
    %1667 = vmatpush1.msra.mxu0 0.0
    %1668 = vmatprep.subr.mxu0 0.0
    %1669 = vmatpush1.msra.mxu0 0.0
    %1670 = vmatprep.subr.mxu0 0.0
    %1671 = vmatpush1.msra.mxu0 0.0
    %1672 = vmatprep.subr.mxu0 0.0
    %1673 = vmatpush1.msra.mxu0 0.0
    %1674 = vmatprep.subr.mxu0 0.0
    %1675 = vmatpush1.msra.mxu0 0.0
    %1676 = vmatprep.subr.mxu0 0.0
    %1677 = vmatpush1.msra.mxu0 0.0
    %1678 = vmatprep.subr.mxu0 0.0
    %1679 = vmatpush1.msra.mxu0 0.0
    %1680 = vmatprep.subr.mxu0 0.0
    %1681 = vmatpush1.msra.mxu0 0.0
    %1682 = vmatprep.subr.mxu0 0.0
    %1683 = vmatpush1.msra.mxu0 0.0
    %1684 = vmatprep.subr.mxu0 0.0
    %1685 = vmatpush1.msra.mxu0 0.0
    %1686 = vmatprep.subr.mxu0 0.0
    %1687 = vmatpush1.msra.mxu0 0.0
    %1688 = vmatprep.subr.mxu0 0.0
    %1689 = vmatpush1.msra.mxu0 0.0
    %1690 = vmatprep.subr.mxu0 0.0
    %1691 = vmatpush1.msra.mxu0 0.0
    %1692 = vmatprep.subr.mxu0 0.0
    %1693 = vmatpush1.msra.mxu0 0.0
    %1694 = vmatprep.subr.mxu0 0.0
    %1695 = vmatpush1.msra.mxu0 0.0
    %1696 = vmatprep.subr.mxu0 0.0
    %1697 = vmatpush1.msra.mxu0 0.0
    %1698 = vmatprep.subr.mxu0 0.0
    %1699 = vmatpush1.msra.mxu0 0.0
    %1700 = vmatprep.subr.mxu0 0.0
    %1701 = vmatpush1.msra.mxu0 0.0
    %1702 = vmatprep.subr.mxu0 0.0
    %1703 = vmatpush1.msra.mxu0 0.0
    %1704 = vmatprep.subr.mxu0 0.0
    %1705 = vmatpush1.msra.mxu0 0.0
    %1706 = vmatprep.mubr.f32.mxu0 0.0
    %1707 = vmatmul.mubr.f32.gmra.mrb[0].mxu0 %v1640
    %v1708 = vpop.f32.mrb[0].mxu0
    %v1709 = vadd.f32 %v1563, %v1708
    %v1710 = vpop.f32.mrb[0].mxu0
    %1711 = vdwg.mxu0
    %v1712 = vadd.f32 %v1709, %v116
    %v1713 = vtanh.pop %v1712
    %v1715 = vsel %vm295, %v1713, 0
    %1717 = vmatprep.subr.mxu0 0.0
    %1718 = vmatpush1.msra.mxu0 %v103
    %1719 = vmatprep.subr.mxu0 0.0
    %1720 = vmatpush1.msra.mxu0 %v104
    %1721 = vmatprep.subr.mxu0 0.0
    %1722 = vmatpush1.msra.mxu0 %v105
    %1723 = vmatprep.subr.mxu0 0.0
    %1724 = vmatpush1.msra.mxu0 %v106
    %1725 = vmatprep.subr.mxu0 0.0
    %1726 = vmatpush1.msra.mxu0 %v107
    %1727 = vmatprep.subr.mxu0 0.0
    %1728 = vmatpush1.msra.mxu0 %v108
    %1729 = vmatprep.subr.mxu0 0.0
    %1730 = vmatpush1.msra.mxu0 %v109
    %1731 = vmatprep.subr.mxu0 0.0
    %1732 = vmatpush1.msra.mxu0 %v110
    %1733 = vmatprep.subr.mxu0 0.0
    %1734 = vmatpush1.msra.mxu0 0.0
    %1735 = vmatprep.subr.mxu0 0.0
    %1736 = vmatpush1.msra.mxu0 0.0
    %1737 = vmatprep.subr.mxu0 0.0
    %1738 = vmatpush1.msra.mxu0 0.0
    %1739 = vmatprep.subr.mxu0 0.0
    %1740 = vmatpush1.msra.mxu0 0.0
    %1741 = vmatprep.subr.mxu0 0.0
    %1742 = vmatpush1.msra.mxu0 0.0
    %1743 = vmatprep.subr.mxu0 0.0
    %1744 = vmatpush1.msra.mxu0 0.0
    %1745 = vmatprep.subr.mxu0 0.0
    %1746 = vmatpush1.msra.mxu0 0.0
    %1747 = vmatprep.subr.mxu0 0.0
    %1748 = vmatpush1.msra.mxu0 0.0
    %1749 = vmatprep.subr.mxu0 0.0
    %1750 = vmatpush1.msra.mxu0 0.0
    %1751 = vmatprep.subr.mxu0 0.0
    %1752 = vmatpush1.msra.mxu0 0.0
    %1753 = vmatprep.subr.mxu0 0.0
    %1754 = vmatpush1.msra.mxu0 0.0
    %1755 = vmatprep.subr.mxu0 0.0
    %1756 = vmatpush1.msra.mxu0 0.0
    %1757 = vmatprep.subr.mxu0 0.0
    %1758 = vmatpush1.msra.mxu0 0.0
    %1759 = vmatprep.subr.mxu0 0.0
    %1760 = vmatpush1.msra.mxu0 0.0
    %1761 = vmatprep.subr.mxu0 0.0
    %1762 = vmatpush1.msra.mxu0 0.0
    %1763 = vmatprep.subr.mxu0 0.0
    %1764 = vmatpush1.msra.mxu0 0.0
    %1765 = vmatprep.subr.mxu0 0.0
    %1766 = vmatpush1.msra.mxu0 0.0
    %1767 = vmatprep.subr.mxu0 0.0
    %1768 = vmatpush1.msra.mxu0 0.0
    %1769 = vmatprep.subr.mxu0 0.0
    %1770 = vmatpush1.msra.mxu0 0.0
    %1771 = vmatprep.subr.mxu0 0.0
    %1772 = vmatpush1.msra.mxu0 0.0
    %1773 = vmatprep.subr.mxu0 0.0
    %1774 = vmatpush1.msra.mxu0 0.0
    %1775 = vmatprep.subr.mxu0 0.0
    %1776 = vmatpush1.msra.mxu0 0.0
    %1777 = vmatprep.subr.mxu0 0.0
    %1778 = vmatpush1.msra.mxu0 0.0
    %1779 = vmatprep.subr.mxu0 0.0
    %1780 = vmatpush1.msra.mxu0 0.0
    %1781 = vmatprep.mubr.f32.mxu0 0.0
    %1782 = vmatmul.mubr.f32.gmra.mrb[0].mxu0 %v1715
    %v1783 = vpop.f32.mrb[0].mxu0
    %v1784 = vadd.f32 0.0, %v1783
    %v1785 = vpop.f32.mrb[0].mxu0
    %1786 = vdwg.mxu0
    %1787 = vmatprep.subr.mxu0 0.0
    %1788 = vmatpush1.msra.mxu0 %v87
    %1789 = vmatprep.subr.mxu0 0.0
    %1790 = vmatpush1.msra.mxu0 %v88
    %1791 = vmatprep.subr.mxu0 0.0
    %1792 = vmatpush1.msra.mxu0 %v89
    %1793 = vmatprep.subr.mxu0 0.0
    %1794 = vmatpush1.msra.mxu0 %v90
    %1795 = vmatprep.subr.mxu0 0.0
    %1796 = vmatpush1.msra.mxu0 %v91
    %1797 = vmatprep.subr.mxu0 0.0
    %1798 = vmatpush1.msra.mxu0 %v92
    %1799 = vmatprep.subr.mxu0 0.0
    %1800 = vmatpush1.msra.mxu0 %v93
    %1801 = vmatprep.subr.mxu0 0.0
    %1802 = vmatpush1.msra.mxu0 %v94
    %1803 = vmatprep.subr.mxu0 0.0
    %1804 = vmatpush1.msra.mxu0 0.0
    %1805 = vmatprep.subr.mxu0 0.0
    %1806 = vmatpush1.msra.mxu0 0.0
    %1807 = vmatprep.subr.mxu0 0.0
    %1808 = vmatpush1.msra.mxu0 0.0
    %1809 = vmatprep.subr.mxu0 0.0
    %1810 = vmatpush1.msra.mxu0 0.0
    %1811 = vmatprep.subr.mxu0 0.0
    %1812 = vmatpush1.msra.mxu0 0.0
    %1813 = vmatprep.subr.mxu0 0.0
    %1814 = vmatpush1.msra.mxu0 0.0
    %1815 = vmatprep.subr.mxu0 0.0
    %1816 = vmatpush1.msra.mxu0 0.0
    %1817 = vmatprep.subr.mxu0 0.0
    %1818 = vmatpush1.msra.mxu0 0.0
    %1819 = vmatprep.subr.mxu0 0.0
    %1820 = vmatpush1.msra.mxu0 0.0
    %1821 = vmatprep.subr.mxu0 0.0
    %1822 = vmatpush1.msra.mxu0 0.0
    %1823 = vmatprep.subr.mxu0 0.0
    %1824 = vmatpush1.msra.mxu0 0.0
    %1825 = vmatprep.subr.mxu0 0.0
    %1826 = vmatpush1.msra.mxu0 0.0
    %1827 = vmatprep.subr.mxu0 0.0
    %1828 = vmatpush1.msra.mxu0 0.0
    %1829 = vmatprep.subr.mxu0 0.0
    %1830 = vmatpush1.msra.mxu0 0.0
    %1831 = vmatprep.subr.mxu0 0.0
    %1832 = vmatpush1.msra.mxu0 0.0
    %1833 = vmatprep.subr.mxu0 0.0
    %1834 = vmatpush1.msra.mxu0 0.0
    %1835 = vmatprep.subr.mxu0 0.0
    %1836 = vmatpush1.msra.mxu0 0.0
    %1837 = vmatprep.subr.mxu0 0.0
    %1838 = vmatpush1.msra.mxu0 0.0
    %1839 = vmatprep.subr.mxu0 0.0
    %1840 = vmatpush1.msra.mxu0 0.0
    %1841 = vmatprep.subr.mxu0 0.0
    %1842 = vmatpush1.msra.mxu0 0.0
    %1843 = vmatprep.subr.mxu0 0.0
    %1844 = vmatpush1.msra.mxu0 0.0
    %1845 = vmatprep.subr.mxu0 0.0
    %1846 = vmatpush1.msra.mxu0 0.0
    %1847 = vmatprep.subr.mxu0 0.0
    %1848 = vmatpush1.msra.mxu0 0.0
    %1849 = vmatprep.subr.mxu0 0.0
    %1850 = vmatpush1.msra.mxu0 0.0
    %1851 = vmatprep.mubr.f32.mxu0 0.0
    %1852 = vmatmul.mubr.f32.gmra.mrb[0].mxu0 %v1640
    %v1853 = vpop.f32.mrb[0].mxu0
    %v1854 = vadd.f32 0.0, %v1853
    %v1855 = vpop.f32.mrb[0].mxu0
    %1856 = vdwg.mxu0
    %v1857 = vld [vmem:[%s370] sm:$0xff]
    %v1858 = vadd.f32 %v1857, %v1854
    %v1859 = vtanh.pop %v1858
    %v1861 = vsel %vm295, %v1859, 0
    %1863 = vmatprep.subr.mxu0 0.0
    %1864 = vmatpush1.msra.mxu0 %v95
    %1865 = vmatprep.subr.mxu0 0.0
    %1866 = vmatpush1.msra.mxu0 %v96
    %1867 = vmatprep.subr.mxu0 0.0
    %1868 = vmatpush1.msra.mxu0 %v97
    %1869 = vmatprep.subr.mxu0 0.0
    %1870 = vmatpush1.msra.mxu0 %v98
    %1871 = vmatprep.subr.mxu0 0.0
    %1872 = vmatpush1.msra.mxu0 %v99
    %1873 = vmatprep.subr.mxu0 0.0
    %1874 = vmatpush1.msra.mxu0 %v100
    %1875 = vmatprep.subr.mxu0 0.0
    %1876 = vmatpush1.msra.mxu0 %v101
    %1877 = vmatprep.subr.mxu0 0.0
    %1878 = vmatpush1.msra.mxu0 %v102
    %1879 = vmatprep.subr.mxu0 0.0
    %1880 = vmatpush1.msra.mxu0 0.0
    %1881 = vmatprep.subr.mxu0 0.0
    %1882 = vmatpush1.msra.mxu0 0.0
    %1883 = vmatprep.subr.mxu0 0.0
    %1884 = vmatpush1.msra.mxu0 0.0
    %1885 = vmatprep.subr.mxu0 0.0
    %1886 = vmatpush1.msra.mxu0 0.0
    %1887 = vmatprep.subr.mxu0 0.0
    %1888 = vmatpush1.msra.mxu0 0.0
    %1889 = vmatprep.subr.mxu0 0.0
    %1890 = vmatpush1.msra.mxu0 0.0
    %1891 = vmatprep.subr.mxu0 0.0
    %1892 = vmatpush1.msra.mxu0 0.0
    %1893 = vmatprep.subr.mxu0 0.0
    %1894 = vmatpush1.msra.mxu0 0.0
    %1895 = vmatprep.subr.mxu0 0.0
    %1896 = vmatpush1.msra.mxu0 0.0
    %1897 = vmatprep.subr.mxu0 0.0
    %1898 = vmatpush1.msra.mxu0 0.0
    %1899 = vmatprep.subr.mxu0 0.0
    %1900 = vmatpush1.msra.mxu0 0.0
    %1901 = vmatprep.subr.mxu0 0.0
    %1902 = vmatpush1.msra.mxu0 0.0
    %1903 = vmatprep.subr.mxu0 0.0
    %1904 = vmatpush1.msra.mxu0 0.0
    %1905 = vmatprep.subr.mxu0 0.0
    %1906 = vmatpush1.msra.mxu0 0.0
    %1907 = vmatprep.subr.mxu0 0.0
    %1908 = vmatpush1.msra.mxu0 0.0
    %1909 = vmatprep.subr.mxu0 0.0
    %1910 = vmatpush1.msra.mxu0 0.0
    %1911 = vmatprep.subr.mxu0 0.0
    %1912 = vmatpush1.msra.mxu0 0.0
    %1913 = vmatprep.subr.mxu0 0.0
    %1914 = vmatpush1.msra.mxu0 0.0
    %1915 = vmatprep.subr.mxu0 0.0
    %1916 = vmatpush1.msra.mxu0 0.0
    %1917 = vmatprep.subr.mxu0 0.0
    %1918 = vmatpush1.msra.mxu0 0.0
    %1919 = vmatprep.subr.mxu0 0.0
    %1920 = vmatpush1.msra.mxu0 0.0
    %1921 = vmatprep.subr.mxu0 0.0
    %1922 = vmatpush1.msra.mxu0 0.0
    %1923 = vmatprep.subr.mxu0 0.0
    %1924 = vmatpush1.msra.mxu0 0.0
    %1925 = vmatprep.subr.mxu0 0.0
    %1926 = vmatpush1.msra.mxu0 0.0
    %1927 = vmatprep.mubr.f32.mxu0 0.0
    %1928 = vmatmul.mubr.f32.gmra.mrb[0].mxu0 %v1861
    %v1929 = vpop.f32.mrb[0].mxu0
    %v1930 = vadd.f32 %v1784, %v1929
    %v1931 = vpop.f32.mrb[0].mxu0
    %1932 = vdwg.mxu0
    %v1933 = vadd.f32 %v1930, %v116
    %v1934 = vtanh.pop %v1933
    %v1936 = vsel %vm295, %v1934, 0
    %1938 = vmatprep.subr.mxu0 0.0
    %1939 = vmatpush1.msra.mxu0 %v103
    %1940 = vmatprep.subr.mxu0 0.0
    %1941 = vmatpush1.msra.mxu0 %v104
    %1942 = vmatprep.subr.mxu0 0.0
    %1943 = vmatpush1.msra.mxu0 %v105
    %1944 = vmatprep.subr.mxu0 0.0
    %1945 = vmatpush1.msra.mxu0 %v106
    %1946 = vmatprep.subr.mxu0 0.0
    %1947 = vmatpush1.msra.mxu0 %v107
    %1948 = vmatprep.subr.mxu0 0.0
    %1949 = vmatpush1.msra.mxu0 %v108
    %1950 = vmatprep.subr.mxu0 0.0
    %1951 = vmatpush1.msra.mxu0 %v109
    %1952 = vmatprep.subr.mxu0 0.0
    %1953 = vmatpush1.msra.mxu0 %v110
    %1954 = vmatprep.subr.mxu0 0.0
    %1955 = vmatpush1.msra.mxu0 0.0
    %1956 = vmatprep.subr.mxu0 0.0
    %1957 = vmatpush1.msra.mxu0 0.0
    %1958 = vmatprep.subr.mxu0 0.0
    %1959 = vmatpush1.msra.mxu0 0.0
    %1960 = vmatprep.subr.mxu0 0.0
    %1961 = vmatpush1.msra.mxu0 0.0
    %1962 = vmatprep.subr.mxu0 0.0
    %1963 = vmatpush1.msra.mxu0 0.0
    %1964 = vmatprep.subr.mxu0 0.0
    %1965 = vmatpush1.msra.mxu0 0.0
    %1966 = vmatprep.subr.mxu0 0.0
    %1967 = vmatpush1.msra.mxu0 0.0
    %1968 = vmatprep.subr.mxu0 0.0
    %1969 = vmatpush1.msra.mxu0 0.0
    %1970 = vmatprep.subr.mxu0 0.0
    %1971 = vmatpush1.msra.mxu0 0.0
    %1972 = vmatprep.subr.mxu0 0.0
    %1973 = vmatpush1.msra.mxu0 0.0
    %1974 = vmatprep.subr.mxu0 0.0
    %1975 = vmatpush1.msra.mxu0 0.0
    %1976 = vmatprep.subr.mxu0 0.0
    %1977 = vmatpush1.msra.mxu0 0.0
    %1978 = vmatprep.subr.mxu0 0.0
    %1979 = vmatpush1.msra.mxu0 0.0
    %1980 = vmatprep.subr.mxu0 0.0
    %1981 = vmatpush1.msra.mxu0 0.0
    %1982 = vmatprep.subr.mxu0 0.0
    %1983 = vmatpush1.msra.mxu0 0.0
    %1984 = vmatprep.subr.mxu0 0.0
    %1985 = vmatpush1.msra.mxu0 0.0
    %1986 = vmatprep.subr.mxu0 0.0
    %1987 = vmatpush1.msra.mxu0 0.0
    %1988 = vmatprep.subr.mxu0 0.0
    %1989 = vmatpush1.msra.mxu0 0.0
    %1990 = vmatprep.subr.mxu0 0.0
    %1991 = vmatpush1.msra.mxu0 0.0
    %1992 = vmatprep.subr.mxu0 0.0
    %1993 = vmatpush1.msra.mxu0 0.0
    %1994 = vmatprep.subr.mxu0 0.0
    %1995 = vmatpush1.msra.mxu0 0.0
    %1996 = vmatprep.subr.mxu0 0.0
    %1997 = vmatpush1.msra.mxu0 0.0
    %1998 = vmatprep.subr.mxu0 0.0
    %1999 = vmatpush1.msra.mxu0 0.0
    %2000 = vmatprep.subr.mxu0 0.0
    %2001 = vmatpush1.msra.mxu0 0.0
    %2002 = vmatprep.mubr.f32.mxu0 0.0
    %2003 = vmatmul.mubr.f32.gmra.mrb[0].mxu0 %v1936
    %v2004 = vpop.f32.mrb[0].mxu0
    %v2005 = vadd.f32 0.0, %v2004
    %v2006 = vpop.f32.mrb[0].mxu0
    %2007 = vdwg.mxu0
    %2008 = vmatprep.subr.mxu0 0.0
    %2009 = vmatpush1.msra.mxu0 %v87
    %2010 = vmatprep.subr.mxu0 0.0
    %2011 = vmatpush1.msra.mxu0 %v88
    %2012 = vmatprep.subr.mxu0 0.0
    %2013 = vmatpush1.msra.mxu0 %v89
    %2014 = vmatprep.subr.mxu0 0.0
    %2015 = vmatpush1.msra.mxu0 %v90
    %2016 = vmatprep.subr.mxu0 0.0
    %2017 = vmatpush1.msra.mxu0 %v91
    %2018 = vmatprep.subr.mxu0 0.0
    %2019 = vmatpush1.msra.mxu0 %v92
    %2020 = vmatprep.subr.mxu0 0.0
    %2021 = vmatpush1.msra.mxu0 %v93
    %2022 = vmatprep.subr.mxu0 0.0
    %2023 = vmatpush1.msra.mxu0 %v94
    %2024 = vmatprep.subr.mxu0 0.0
    %2025 = vmatpush1.msra.mxu0 0.0
    %2026 = vmatprep.subr.mxu0 0.0
    %2027 = vmatpush1.msra.mxu0 0.0
    %2028 = vmatprep.subr.mxu0 0.0
    %2029 = vmatpush1.msra.mxu0 0.0
    %2030 = vmatprep.subr.mxu0 0.0
    %2031 = vmatpush1.msra.mxu0 0.0
    %2032 = vmatprep.subr.mxu0 0.0
    %2033 = vmatpush1.msra.mxu0 0.0
    %2034 = vmatprep.subr.mxu0 0.0
    %2035 = vmatpush1.msra.mxu0 0.0
    %2036 = vmatprep.subr.mxu0 0.0
    %2037 = vmatpush1.msra.mxu0 0.0
    %2038 = vmatprep.subr.mxu0 0.0
    %2039 = vmatpush1.msra.mxu0 0.0
    %2040 = vmatprep.subr.mxu0 0.0
    %2041 = vmatpush1.msra.mxu0 0.0
    %2042 = vmatprep.subr.mxu0 0.0
    %2043 = vmatpush1.msra.mxu0 0.0
    %2044 = vmatprep.subr.mxu0 0.0
    %2045 = vmatpush1.msra.mxu0 0.0
    %2046 = vmatprep.subr.mxu0 0.0
    %2047 = vmatpush1.msra.mxu0 0.0
    %2048 = vmatprep.subr.mxu0 0.0
    %2049 = vmatpush1.msra.mxu0 0.0
    %2050 = vmatprep.subr.mxu0 0.0
    %2051 = vmatpush1.msra.mxu0 0.0
    %2052 = vmatprep.subr.mxu0 0.0
    %2053 = vmatpush1.msra.mxu0 0.0
    %2054 = vmatprep.subr.mxu0 0.0
    %2055 = vmatpush1.msra.mxu0 0.0
    %2056 = vmatprep.subr.mxu0 0.0
    %2057 = vmatpush1.msra.mxu0 0.0
    %2058 = vmatprep.subr.mxu0 0.0
    %2059 = vmatpush1.msra.mxu0 0.0
    %2060 = vmatprep.subr.mxu0 0.0
    %2061 = vmatpush1.msra.mxu0 0.0
    %2062 = vmatprep.subr.mxu0 0.0
    %2063 = vmatpush1.msra.mxu0 0.0
    %2064 = vmatprep.subr.mxu0 0.0
    %2065 = vmatpush1.msra.mxu0 0.0
    %2066 = vmatprep.subr.mxu0 0.0
    %2067 = vmatpush1.msra.mxu0 0.0
    %2068 = vmatprep.subr.mxu0 0.0
    %2069 = vmatpush1.msra.mxu0 0.0
    %2070 = vmatprep.subr.mxu0 0.0
    %2071 = vmatpush1.msra.mxu0 0.0
    %2072 = vmatprep.mubr.f32.mxu0 0.0
    %2073 = vmatmul.mubr.f32.gmra.mrb[0].mxu0 %v1861
    %v2074 = vpop.f32.mrb[0].mxu0
    %v2075 = vadd.f32 0.0, %v2074
    %v2076 = vpop.f32.mrb[0].mxu0
    %2077 = vdwg.mxu0
    %v2078 = vld [vmem:[%s383] sm:$0xff]
    %v2079 = vadd.f32 %v2078, %v2075
    %v2080 = vtanh.pop %v2079
    %v2082 = vsel %vm295, %v2080, 0
    %2084 = vmatprep.subr.mxu0 0.0
    %2085 = vmatpush1.msra.mxu0 %v95
    %2086 = vmatprep.subr.mxu0 0.0
    %2087 = vmatpush1.msra.mxu0 %v96
    %2088 = vmatprep.subr.mxu0 0.0
    %2089 = vmatpush1.msra.mxu0 %v97
    %2090 = vmatprep.subr.mxu0 0.0
    %2091 = vmatpush1.msra.mxu0 %v98
    %2092 = vmatprep.subr.mxu0 0.0
    %2093 = vmatpush1.msra.mxu0 %v99
    %2094 = vmatprep.subr.mxu0 0.0
    %2095 = vmatpush1.msra.mxu0 %v100
    %2096 = vmatprep.subr.mxu0 0.0
    %2097 = vmatpush1.msra.mxu0 %v101
    %2098 = vmatprep.subr.mxu0 0.0
    %2099 = vmatpush1.msra.mxu0 %v102
    %2100 = vmatprep.subr.mxu0 0.0
    %2101 = vmatpush1.msra.mxu0 0.0
    %2102 = vmatprep.subr.mxu0 0.0
    %2103 = vmatpush1.msra.mxu0 0.0
    %2104 = vmatprep.subr.mxu0 0.0
    %2105 = vmatpush1.msra.mxu0 0.0
    %2106 = vmatprep.subr.mxu0 0.0
    %2107 = vmatpush1.msra.mxu0 0.0
    %2108 = vmatprep.subr.mxu0 0.0
    %2109 = vmatpush1.msra.mxu0 0.0
    %2110 = vmatprep.subr.mxu0 0.0
    %2111 = vmatpush1.msra.mxu0 0.0
    %2112 = vmatprep.subr.mxu0 0.0
    %2113 = vmatpush1.msra.mxu0 0.0
    %2114 = vmatprep.subr.mxu0 0.0
    %2115 = vmatpush1.msra.mxu0 0.0
    %2116 = vmatprep.subr.mxu0 0.0
    %2117 = vmatpush1.msra.mxu0 0.0
    %2118 = vmatprep.subr.mxu0 0.0
    %2119 = vmatpush1.msra.mxu0 0.0
    %2120 = vmatprep.subr.mxu0 0.0
    %2121 = vmatpush1.msra.mxu0 0.0
    %2122 = vmatprep.subr.mxu0 0.0
    %2123 = vmatpush1.msra.mxu0 0.0
    %2124 = vmatprep.subr.mxu0 0.0
    %2125 = vmatpush1.msra.mxu0 0.0
    %2126 = vmatprep.subr.mxu0 0.0
    %2127 = vmatpush1.msra.mxu0 0.0
    %2128 = vmatprep.subr.mxu0 0.0
    %2129 = vmatpush1.msra.mxu0 0.0
    %2130 = vmatprep.subr.mxu0 0.0
    %2131 = vmatpush1.msra.mxu0 0.0
    %2132 = vmatprep.subr.mxu0 0.0
    %2133 = vmatpush1.msra.mxu0 0.0
    %2134 = vmatprep.subr.mxu0 0.0
    %2135 = vmatpush1.msra.mxu0 0.0
    %2136 = vmatprep.subr.mxu0 0.0
    %2137 = vmatpush1.msra.mxu0 0.0
    %2138 = vmatprep.subr.mxu0 0.0
    %2139 = vmatpush1.msra.mxu0 0.0
    %2140 = vmatprep.subr.mxu0 0.0
    %2141 = vmatpush1.msra.mxu0 0.0
    %2142 = vmatprep.subr.mxu0 0.0
    %2143 = vmatpush1.msra.mxu0 0.0
    %2144 = vmatprep.subr.mxu0 0.0
    %2145 = vmatpush1.msra.mxu0 0.0
    %2146 = vmatprep.subr.mxu0 0.0
    %2147 = vmatpush1.msra.mxu0 0.0
    %2148 = vmatprep.mubr.f32.mxu0 0.0
    %2149 = vmatmul.mubr.f32.gmra.mrb[0].mxu0 %v2082
    %v2150 = vpop.f32.mrb[0].mxu0
    %v2151 = vadd.f32 %v2005, %v2150
    %v2152 = vpop.f32.mrb[0].mxu0
    %2153 = vdwg.mxu0
    %v2154 = vadd.f32 %v2151, %v116
    %v2155 = vtanh.pop %v2154
    %v2156 = vld [vmem:[%s7] sm:$0xff]
    %v2157 = vld [vmem:[%s7 + $0x8] sm:$0xff]
    %v2158 = vld [vmem:[%s7 + $0x10] sm:$0xff]
    %v2159 = vld [vmem:[%s7 + $0x18] sm:$0xff]
    %v2160 = vld [vmem:[%s7 + $0x20] sm:$0xff]
    %v2161 = vld [vmem:[%s7 + $0x28] sm:$0xff]
    %v2162 = vld [vmem:[%s7 + $0x30] sm:$0xff]
    %v2163 = vld [vmem:[%s7 + $0x38] sm:$0xff]
    %v2164 = vld [vmem:[%s8] sm:$0x1]
    %v2166 = vlaneseq
    %v2167 = vshrl.u32 %v2166, 7
    %v2168 = vsub.s32 0, %v2167
    %v2169 = vrot.slane %v2164, %v2168
    %v2172 = vsel %vm295, %v2155, 0
    %2174 = vmatprep.subr.mxu0 0.0
    %2175 = vmatpush1.msra.mxu0 %v2156
    %2176 = vmatprep.subr.mxu0 0.0
    %2177 = vmatpush1.msra.mxu0 %v2157
    %2178 = vmatprep.subr.mxu0 0.0
    %2179 = vmatpush1.msra.mxu0 %v2158
    %2180 = vmatprep.subr.mxu0 0.0
    %2181 = vmatpush1.msra.mxu0 %v2159
    %2182 = vmatprep.subr.mxu0 0.0
    %2183 = vmatpush1.msra.mxu0 %v2160
    %2184 = vmatprep.subr.mxu0 0.0
    %2185 = vmatpush1.msra.mxu0 %v2161
    %2186 = vmatprep.subr.mxu0 0.0
    %2187 = vmatpush1.msra.mxu0 %v2162
    %2188 = vmatprep.subr.mxu0 0.0
    %2189 = vmatpush1.msra.mxu0 %v2163
    %2190 = vmatprep.subr.mxu0 0.0
    %2191 = vmatpush1.msra.mxu0 0.0
    %2192 = vmatprep.subr.mxu0 0.0
    %2193 = vmatpush1.msra.mxu0 0.0
    %2194 = vmatprep.subr.mxu0 0.0
    %2195 = vmatpush1.msra.mxu0 0.0
    %2196 = vmatprep.subr.mxu0 0.0
    %2197 = vmatpush1.msra.mxu0 0.0
    %2198 = vmatprep.subr.mxu0 0.0
    %2199 = vmatpush1.msra.mxu0 0.0
    %2200 = vmatprep.subr.mxu0 0.0
    %2201 = vmatpush1.msra.mxu0 0.0
    %2202 = vmatprep.subr.mxu0 0.0
    %2203 = vmatpush1.msra.mxu0 0.0
    %2204 = vmatprep.subr.mxu0 0.0
    %2205 = vmatpush1.msra.mxu0 0.0
    %2206 = vmatprep.subr.mxu0 0.0
    %2207 = vmatpush1.msra.mxu0 0.0
    %2208 = vmatprep.subr.mxu0 0.0
    %2209 = vmatpush1.msra.mxu0 0.0
    %2210 = vmatprep.subr.mxu0 0.0
    %2211 = vmatpush1.msra.mxu0 0.0
    %2212 = vmatprep.subr.mxu0 0.0
    %2213 = vmatpush1.msra.mxu0 0.0
    %2214 = vmatprep.subr.mxu0 0.0
    %2215 = vmatpush1.msra.mxu0 0.0
    %2216 = vmatprep.subr.mxu0 0.0
    %2217 = vmatpush1.msra.mxu0 0.0
    %2218 = vmatprep.subr.mxu0 0.0
    %2219 = vmatpush1.msra.mxu0 0.0
    %2220 = vmatprep.subr.mxu0 0.0
    %2221 = vmatpush1.msra.mxu0 0.0
    %2222 = vmatprep.subr.mxu0 0.0
    %2223 = vmatpush1.msra.mxu0 0.0
    %2224 = vmatprep.subr.mxu0 0.0
    %2225 = vmatpush1.msra.mxu0 0.0
    %2226 = vmatprep.subr.mxu0 0.0
    %2227 = vmatpush1.msra.mxu0 0.0
    %2228 = vmatprep.subr.mxu0 0.0
    %2229 = vmatpush1.msra.mxu0 0.0
    %2230 = vmatprep.subr.mxu0 0.0
    %2231 = vmatpush1.msra.mxu0 0.0
    %2232 = vmatprep.subr.mxu0 0.0
    %2233 = vmatpush1.msra.mxu0 0.0
    %2234 = vmatprep.subr.mxu0 0.0
    %2235 = vmatpush1.msra.mxu0 0.0
    %2236 = vmatprep.subr.mxu0 0.0
    %2237 = vmatpush1.msra.mxu0 0.0
    %2238 = vmatprep.mubr.f32.mxu0 0.0
    %2239 = vmatmul.mubr.f32.gmra.mrb[0].mxu0 %v2172
    %v2240 = vpop.f32.mrb[0].mxu0
    %v2241 = vadd.f32 %v2169, %v2240
    %v2242 = vpop.f32.mrb[0].mxu0
    %2243 = vdwg.mxu0
    %vm2244 = vcmask 15360
    %2245 = vst.msk [vmem:[%s9] sm:$0xff] %vm2244, %v2241
    // Predicated region
    $region54: #{tpu_custom_call.1} parent=1 // pred_check
      _
    $region55: #{tpu_custom_call.1} parent=1 // pred_check_branch
      %2247 = sbr.rel (0) target = $region57
    $region56: #{tpu_custom_call.1} parent=1 // pred_region
      _
    $region57: #{tpu_custom_call.1} parent=1 // pred_fallthru
      _
    // Predicated region
    $region58: #{tpu_custom_call.1} parent=1 // pred_check
      _
    $region59: #{tpu_custom_call.1} parent=1 // pred_check_branch
      %2249 = sbr.rel (0) target = $region61
    $region60: #{tpu_custom_call.1} parent=1 // pred_region
      _
    $region61: #{tpu_custom_call.1} parent=1 // pred_fallthru
      _
    %2250 = vsyncpa [#allocation4], 1
    %2251 = vsyncpa [#allocation6], 1
    %2252 = vsyncpa [#allocation9], 1

</llo_original>
